<compile_context>
chip_gen: v6e
topology: v6e:2x2x1
jax: 0.10.0
libtpu: 0.0.40
codegen_flags: <defaults>
</compile_context>

<pallas_src>
import functools

import jax
import jax.numpy as jnp
from jax import lax
from jax.experimental import pallas as pl
from jax.experimental.pallas import tpu as pltpu

BN_EPS = 1e-5
LANE = 128
ROWS = 16                      # sublane granularity (native bf16 tile is (16, 128))
VMEM_LIMIT = 32 * 1024 * 1024


def _round_up(x, m):
    return (x + m - 1) // m * m


def _conv_out_len(t, k=3, s=2, p=1):
    return (t + 2 * p - k) // s + 1


def _pick_tile(t_out, pref):
    tile = min(_round_up(pref, ROWS), _round_up(max(t_out, 1), ROWS))
    return max(tile, ROWS)


# ---------------------------------------------------------------------------
# Conv (k=3, s=2, p=1) + global BN statistics, one (batch, time-tile) per step.
# ---------------------------------------------------------------------------
def _conv_stats_kernel(pa_ref, ph_ref, w01_ref, w2_ref, y_ref, sum_ref, ssq_ref,
                       *, t_valid):
    # pa_ref : (1, tile, 2*Cin)  bf16  pairs (x_pad[2t], x_pad[2t+1])
    # ph_ref : (1, ROWS, 2*Cin)  bf16  halo = pair block right after pa (row 0 used)
    # w01_ref: (2*Cin, Cout)     bf16  taps 0,1 stacked along the contraction dim
    # w2_ref : (Cin, Cout)       bf16  tap 2
    # y_ref  : (1, tile, Cout)   bf16  pre-BN conv output
    # sum/ssq: (1, 1, 1, Cout)   f32   per-tile partial BN statistics
    c_in = w2_ref.shape[0]
    tile = pa_ref.shape[1]

    pa = pa_ref[0]                                            # (tile, 2*Cin)
    halo = ph_ref[0, 0:1, 0:c_in]                             # (1, Cin)
    # tap2 rows: x_pad[2t+2] == first half of the *next* pair.
    tap2 = jnp.concatenate([pa[1:, 0:c_in], halo], axis=0)    # (tile, Cin)

    # MXU conv with f32 accumulation: K = 2*Cin GEMM (taps 0,1) + K = Cin (tap 2).
    y = jnp.dot(pa, w01_ref[...], preferred_element_type=jnp.float32)
    y = y + jnp.dot(tap2, w2_ref[...], preferred_element_type=jnp.float32)

    # Zero rows beyond the real output length so they contribute nothing to the
    # global BN statistics (and the stored activation stays clean).
    t0 = pl.program_id(1) * tile
    row = lax.broadcasted_iota(jnp.int32, y.shape, 0)
    y = jnp.where(row + t0 < t_valid, y, 0.0)

    y_ref[0] = y.astype(y_ref.dtype)                          # bf16 activation
    # Partial statistics from the f32 accumulator (before the bf16 cast).
    # NOTE: variance is later formed as E[y^2] - mean^2 in f32; partial per-tile
    # sums keep the accumulation well conditioned for typical conv outputs.
    sum_ref[0, 0] = jnp.sum(y, axis=0, keepdims=True)
    ssq_ref[0, 0] = jnp.sum(y * y, axis=0, keepdims=True)


# ---------------------------------------------------------------------------
# Folded BatchNorm affine + ReLU (final layer only).  f32 math (v5e-friendly).
# ---------------------------------------------------------------------------
def _bn_relu_kernel(y_ref, scale_ref, shift_ref, o_ref):
    y = y_ref[0].astype(jnp.float32)
    o_ref[0] = jnp.maximum(y * scale_ref[...] + shift_ref[...], 0.0)


# ---------------------------------------------------------------------------
# Per-layer wrappers.
# ---------------------------------------------------------------------------
def _to_pairs(x, tile, n_t):
    """x: (B, T_in_real, C_in_p) channels-last bf16 (post-activation or raw).

    Returns (B, (n_t+1)*tile, 2*C_in_p): pair p = (x_pad[2p], x_pad[2p+1]) where
    x_pad is x zero-padded by 1 on the left (conv padding) and out to the full
    pair extent on the right.  A single XLA pad + free reshape (no per-tap
    duplication); the BN+ReLU of the previous layer fuses into this same pass.
    """
    B, t_real, c_in_p = x.shape
    P = (n_t + 1) * tile
    xp = jnp.pad(x, ((0, 0), (1, 2 * P - t_real - 1), (0, 0)))
    return xp.reshape(B, P, 2 * c_in_p)


def _conv_stats(x_pairs, w, c_in_p, c_out_p, tile, n_t, t_out):
    """One Conv1d(k=3,s=2,p=1,bias=False) + global per-channel sum / sumsq."""
    B = x_pairs.shape[0]
    C_out, C_in, K = w.shape
    assert K == 3 and C_in <= c_in_p and C_out <= c_out_p

    wt = jnp.transpose(w.astype(jnp.float32), (2, 1, 0))          # (3, C_in, C_out)
    wt = jnp.pad(wt, ((0, 0), (0, c_in_p - C_in), (0, c_out_p - C_out)))
    w01 = jnp.concatenate([wt[0], wt[1]], axis=0).astype(jnp.bfloat16)
    w2 = wt[2].astype(jnp.bfloat16)

    y, s, q = pl.pallas_call(
        functools.partial(_conv_stats_kernel, t_valid=t_out),
        grid=(B, n_t),
        in_specs=[
            pl.BlockSpec((1, tile, 2 * c_in_p), lambda b, i: (b, i, 0)),
            # Halo: the pair block immediately after this tile (same array).
            pl.BlockSpec((1, ROWS, 2 * c_in_p),
                         lambda b, i: (b, (i + 1) * (tile // ROWS), 0)),
            pl.BlockSpec((2 * c_in_p, c_out_p), lambda b, i: (0, 0)),
            pl.BlockSpec((c_in_p, c_out_p), lambda b, i: (0, 0)),
        ],
        out_specs=[
            pl.BlockSpec((1, tile, c_out_p), lambda b, i: (b, i, 0)),
            pl.BlockSpec((1, 1, 1, c_out_p), lambda b, i: (b, i, 0, 0)),
            pl.BlockSpec((1, 1, 1, c_out_p), lambda b, i: (b, i, 0, 0)),
        ],
        out_shape=[
            jax.ShapeDtypeStruct((B, n_t * tile, c_out_p), jnp.bfloat16),
            jax.ShapeDtypeStruct((B, n_t, 1, c_out_p), jnp.float32),
            jax.ShapeDtypeStruct((B, n_t, 1, c_out_p), jnp.float32),
        ],
        compiler_params=pltpu.CompilerParams(
            dimension_semantics=("parallel", "parallel"),
            vmem_limit_bytes=VMEM_LIMIT),
    )(x_pairs, x_pairs, w01, w2)

    return y, jnp.sum(s, axis=(0, 1, 2)), jnp.sum(q, axis=(0, 1, 2))


def _fold_bn(s, q, n_real, gamma, beta, c_out_p):
    """Training-mode BatchNorm1d (biased variance) folded into scale/shift."""
    C_out = gamma.shape[0]
    n = jnp.float32(n_real)
    mean = s / n
    var = jnp.maximum(q / n - mean * mean, 0.0)
    g = jnp.pad(gamma.astype(jnp.float32), (0, c_out_p - C_out))
    b = jnp.pad(beta.astype(jnp.float32), (0, c_out_p - C_out))
    scale = g * lax.rsqrt(var + BN_EPS)          # padded channels: scale = shift = 0
    shift = b - mean * scale
    return scale.reshape(1, c_out_p), shift.reshape(1, c_out_p)


def _bn_relu(y, scale, shift, tile, n_t):
    B, R, c = y.shape
    return pl.pallas_call(
        _bn_relu_kernel,
        grid=(B, n_t),
        in_specs=[
            pl.BlockSpec((1, tile, c), lambda b, i: (b, i, 0)),
            pl.BlockSpec((1, c), lambda b, i: (0, 0)),
            pl.BlockSpec((1, c), lambda b, i: (0, 0)),
        ],
        out_specs=pl.BlockSpec((1, tile, c), lambda b, i: (b, i, 0)),
        out_shape=jax.ShapeDtypeStruct((B, R, c), jnp.float32),
        compiler_params=pltpu.CompilerParams(
            dimension_semantics=("parallel", "parallel"),
            vmem_limit_bytes=VMEM_LIMIT),
    )(y, scale, shift)


# ---------------------------------------------------------------------------
# Full forward.
# ---------------------------------------------------------------------------
def init_feature_extractor_params(key, in_channels, out_channels):
    """Deterministic parameter init mirroring the module's __init__ shapes."""
    mid = out_channels // 2
    k1, k2 = jax.random.split(key, 2)
    return {
        "w1": 0.1 * jax.random.normal(k1, (mid, in_channels, 3), dtype=jnp.float32),
        "w2": 0.1 * jax.random.normal(k2, (out_channels, mid, 3), dtype=jnp.float32),
        "g1": jnp.ones((mid,), jnp.float32),
        "b1": jnp.zeros((mid,), jnp.float32),
        "g2": jnp.ones((out_channels,), jnp.float32),
        "b2": jnp.zeros((out_channels,), jnp.float32),
    }


def feature_extractor_forward(signal, params, *, tile_rows=1024):
    """signal: (B, T, C_in) -> (B, T_out, out_channels), matching torch forward."""
    B, T, C_in = signal.shape
    w1, w2 = params["w1"], params["w2"]
    C_mid, C_out = w1.shape[0], w2.shape[0]
    c_in_p = _round_up(C_in, LANE)
    c_mid_p = _round_up(C_mid, LANE)
    c_out_p = _round_up(C_out, LANE)
    # TODO(synk): for tiny real channel counts (demo: 16/32 padded to 128) the
    # intermediate HBM footprint is dominated by lane padding; pack several time
    # steps per 128-lane group if that matters (real wav2vec2 widths make it moot).

    T1 = _conv_out_len(T)
    T2 = _conv_out_len(T1)
    tile1, tile2 = _pick_tile(T1, tile_rows), _pick_tile(T2, tile_rows)
    n_t1, n_t2 = -(-T1 // tile1), -(-T2 // tile2)

    # ---- layer 1: conv + global BN statistics (bf16 in/out, f32 accumulation) --
    x = jnp.pad(signal.astype(jnp.bfloat16), ((0, 0), (0, 0), (0, c_in_p - C_in)))
    y1, s1, q1 = _conv_stats(_to_pairs(x, tile1, n_t1), w1,
                             c_in_p, c_mid_p, tile1, n_t1, T1)
    scale1, shift1 = _fold_bn(s1, q1, B * T1, params["g1"], params["b1"], c_mid_p)

    # ---- layer-1 BN+ReLU fused into the repack that builds layer-2's operand ----
    h1 = jnp.maximum(y1[:, :T1, :].astype(jnp.float32) * scale1 + shift1, 0.0)
    h1 = h1.astype(jnp.bfloat16)

    # ---- layer 2 ---------------------------------------------------------------
    y2, s2, q2 = _conv_stats(_to_pairs(h1, tile2, n_t2), w2,
                             c_mid_p, c_out_p, tile2, n_t2, T2)
    scale2, shift2 = _fold_bn(s2, q2, B * T2, params["g2"], params["b2"], c_out_p)

    # ---- final folded BN + ReLU epilogue (f32) ---------------------------------
    out = _bn_relu(y2, scale2, shift2, tile2, n_t2)
    return out[:, :T2, :C_out]


# ---------------------------------------------------------------------------
# Pure-JAX f32 reference (PyTorch training-mode semantics) for a sanity check.
# ---------------------------------------------------------------------------
def _reference_forward(signal, params):
    def conv(x, w):
        t_out = _conv_out_len(x.shape[1])
        xp = jnp.pad(x, ((0, 0), (1, 1), (0, 0)))
        wt = jnp.transpose(w, (2, 1, 0))                    # (3, C_in, C_out)
        return sum(jnp.einsum("btc,co->bto", xp[:, k:k + 2 * t_out:2, :], wt[k])
                   for k in range(3))

    def bn_relu(y, g, b):
        m = jnp.mean(y, axis=(0, 1))
        v = jnp.mean(jnp.square(y - m), axis=(0, 1))
        return jnp.maximum((y - m) * lax.rsqrt(v + BN_EPS) * g + b, 0.0)

    h = bn_relu(conv(signal, params["w1"]), params["g1"], params["b1"])
    return bn_relu(conv(h, params["w2"]), params["g2"], params["b2"])


if __name__ == "__main__":
    key = jax.random.PRNGKey(0)
    k_in, k_par = jax.random.split(key)

    B, T = 2, 16
    in_channels, out_channels = 8, 32

    signal = jax.random.normal(k_in, (B, T, in_channels), dtype=jnp.float32)
    params = init_feature_extractor_params(k_par, in_channels, out_channels)

    fwd = jax.jit(feature_extractor_forward)
    out = jax.block_until_ready(fwd(signal, params))

    # (B, T, C_in)=(2,16,8) -> layer1 T=8, C=16 -> layer2 T=4, C=32
    assert out.shape == (B, 4, out_channels), out.shape
    assert bool(jnp.all(out >= 0.0)) and bool(jnp.all(jnp.isfinite(out)))

    ref = _reference_forward(signal, params)
    max_err = float(jnp.max(jnp.abs(out - ref)))
    assert max_err < 0.1, f"max abs error vs f32 reference: {max_err}"

    print("KERNEL_OK")
</pallas_src>

<mosaic_0001>
module attributes {stable_mosaic.version = 11 : i64} {
  func.func @_bn_relu_kernel(%arg0: i32, %arg1: i32, %arg2: memref<1x16x128xbf16, #tpu.memory_space<vmem>>, %arg3: memref<1x128xf32, #tpu.memory_space<vmem>>, %arg4: memref<1x128xf32, #tpu.memory_space<vmem>>, %arg5: memref<1x16x128xf32, #tpu.memory_space<vmem>>) attributes {dimension_semantics = [#tpu.dimension_semantics<parallel>, #tpu.dimension_semantics<parallel>], iteration_bounds = array<i64: 2, 1>, scalar_prefetch = 0 : i64, scratch_operands = 0 : i64, tpu.core_type = #tpu.core_type<tc>, window_params = [{transform_indices = @transform_0, window_bounds = array<i64: 1, 16, 128>}, {pipeline_mode = #tpu.pipeline_mode<synchronous>, transform_indices = @transform_1, window_bounds = array<i64: 1, 128>}, {pipeline_mode = #tpu.pipeline_mode<synchronous>, transform_indices = @transform_2, window_bounds = array<i64: 1, 128>}, {transform_indices = @transform_3, window_bounds = array<i64: 1, 16, 128>}]} {
    %c0 = arith.constant 0 : index
    %c0_0 = arith.constant 0 : index
    %c0_1 = arith.constant 0 : index
    %0 = vector.load %arg2[%c0, %c0_0, %c0_1] : memref<1x16x128xbf16, #tpu.memory_space<vmem>>, vector<1x16x128xbf16>
    %1 = vector.shape_cast %0 : vector<1x16x128xbf16> to vector<16x128xbf16>
    %2 = arith.extf %1 : vector<16x128xbf16> to vector<16x128xf32>
    %c0_2 = arith.constant 0 : index
    %c0_3 = arith.constant 0 : index
    %3 = vector.load %arg3[%c0_2, %c0_3] : memref<1x128xf32, #tpu.memory_space<vmem>>, vector<1x128xf32>
    %4 = vector.broadcast %3 : vector<1x128xf32> to vector<16x128xf32>
    %5 = arith.mulf %2, %4 : vector<16x128xf32>
    %c0_4 = arith.constant 0 : index
    %c0_5 = arith.constant 0 : index
    %6 = vector.load %arg4[%c0_4, %c0_5] : memref<1x128xf32, #tpu.memory_space<vmem>>, vector<1x128xf32>
    %7 = vector.broadcast %6 : vector<1x128xf32> to vector<16x128xf32>
    %8 = arith.addf %5, %7 : vector<16x128xf32>
    %cst = arith.constant 0.000000e+00 : f32
    %9 = vector.broadcast %cst : f32 to vector<16x128xf32>
    %10 = arith.maximumf %8, %9 : vector<16x128xf32>
    %c0_6 = arith.constant 0 : index
    %c0_7 = arith.constant 0 : index
    %c0_8 = arith.constant 0 : index
    %11 = vector.load %arg5[%c0_6, %c0_7, %c0_8] : memref<1x16x128xf32, #tpu.memory_space<vmem>>, vector<1x16x128xf32>
    %12 = vector.shape_cast %11 : vector<1x16x128xf32> to vector<16x128xf32>
    %13 = vector.shape_cast %10 : vector<16x128xf32> to vector<1x16x128xf32>
    tpu.vector_store %arg5[%c0_6, %c0_7, %c0_8], %13 {strides = array<i32>} : memref<1x16x128xf32, #tpu.memory_space<vmem>>, vector<1x16x128xf32>,
    return
  }
  func.func @transform_0(%arg0: i32, %arg1: i32) -> (i32, i32, i32) {
    %c0_i32 = arith.constant 0 : i32
    %c0_i32_0 = arith.constant 0 : i32
    return %arg0, %arg1, %c0_i32 : i32, i32, i32
  }
  func.func @transform_1(%arg0: i32, %arg1: i32) -> (i32, i32) {
    %c0_i32 = arith.constant 0 : i32
    %c0_i32_0 = arith.constant 0 : i32
    %c0_i32_1 = arith.constant 0 : i32
    return %c0_i32, %c0_i32_0 : i32, i32
  }
  func.func @transform_2(%arg0: i32, %arg1: i32) -> (i32, i32) {
    %c0_i32 = arith.constant 0 : i32
    %c0_i32_0 = arith.constant 0 : i32
    %c0_i32_1 = arith.constant 0 : i32
    return %c0_i32, %c0_i32_0 : i32, i32
  }
  func.func @transform_3(%arg0: i32, %arg1: i32) -> (i32, i32, i32) {
    %c0_i32 = arith.constant 0 : i32
    %c0_i32_0 = arith.constant 0 : i32
    return %arg0, %arg1, %c0_i32 : i32, i32, i32
  }
}

module attributes {stable_mosaic.version = 11 : i64} {
  func.func @_conv_stats_kernel(%arg0: i32, %arg1: i32, %arg2: memref<1x16x256xbf16, #tpu.memory_space<vmem>>, %arg3: memref<1x16x256xbf16, #tpu.memory_space<vmem>>, %arg4: memref<256x128xbf16, #tpu.memory_space<vmem>>, %arg5: memref<128x128xbf16, #tpu.memory_space<vmem>>, %arg6: memref<1x16x128xbf16, #tpu.memory_space<vmem>>, %arg7: memref<1x1x1x128xf32, #tpu.memory_space<vmem>>, %arg8: memref<1x1x1x128xf32, #tpu.memory_space<vmem>>) attributes {dimension_semantics = [#tpu.dimension_semantics<parallel>, #tpu.dimension_semantics<parallel>], iteration_bounds = array<i64: 2, 1>, scalar_prefetch = 0 : i64, scratch_operands = 0 : i64, tpu.core_type = #tpu.core_type<tc>, window_params = [{transform_indices = @transform_0, window_bounds = array<i64: 1, 16, 256>}, {transform_indices = @transform_1, window_bounds = array<i64: 1, 16, 256>}, {pipeline_mode = #tpu.pipeline_mode<synchronous>, transform_indices = @transform_2, window_bounds = array<i64: 256, 128>}, {pipeline_mode = #tpu.pipeline_mode<synchronous>, transform_indices = @transform_3, window_bounds = array<i64: 128, 128>}, {transform_indices = @transform_4, window_bounds = array<i64: 1, 16, 128>}, {transform_indices = @transform_5, window_bounds = array<i64: 1, 1, 1, 128>}, {transform_indices = @transform_6, window_bounds = array<i64: 1, 1, 1, 128>}]} {
    %c0 = arith.constant 0 : index
    %c0_0 = arith.constant 0 : index
    %c0_1 = arith.constant 0 : index
    %0 = vector.load %arg2[%c0, %c0_0, %c0_1] : memref<1x16x256xbf16, #tpu.memory_space<vmem>>, vector<1x16x256xbf16>
    %1 = vector.shape_cast %0 : vector<1x16x256xbf16> to vector<16x256xbf16>
    %c0_2 = arith.constant 0 : index
    %c0_3 = arith.constant 0 : index
    %c0_4 = arith.constant 0 : index
    %2 = vector.load %arg3[%c0_2, %c0_3, %c0_4] : memref<1x16x256xbf16, #tpu.memory_space<vmem>>, vector<1x1x128xbf16>
    %3 = vector.shape_cast %2 : vector<1x1x128xbf16> to vector<1x128xbf16>
    %4 = vector.extract_strided_slice %1 {offsets = [1, 0], sizes = [15, 128], strides = [1, 1]} : vector<16x256xbf16> to vector<15x128xbf16>
    %5 = tpu.concatenate %4, %3 in 0 : vector<15x128xbf16>, vector<1x128xbf16> -> vector<16x128xbf16>
    %c0_5 = arith.constant 0 : index
    %c0_6 = arith.constant 0 : index
    %6 = vector.load %arg4[%c0_5, %c0_6] : memref<256x128xbf16, #tpu.memory_space<vmem>>, vector<256x128xbf16>
    %cst = arith.constant dense<0.000000e+00> : vector<16x128xf32>
    %7 = tpu.matmul %1, %6, %cst {dimension_numbers = #tpu.dot_dimension_numbers<[1], [0], [0], [1], [0, 0, 1, 1], [], []>} : vector<16x256xbf16>, vector<256x128xbf16>, vector<16x128xf32> -> vector<16x128xf32>
    %c0_7 = arith.constant 0 : index
    %c0_8 = arith.constant 0 : index
    %8 = vector.load %arg5[%c0_7, %c0_8] : memref<128x128xbf16, #tpu.memory_space<vmem>>, vector<128x128xbf16>
    %cst_9 = arith.constant dense<0.000000e+00> : vector<16x128xf32>
    %9 = tpu.matmul %5, %8, %cst_9 {dimension_numbers = #tpu.dot_dimension_numbers<[1], [0], [0], [1], [0, 0, 1, 1], [], []>} : vector<16x128xbf16>, vector<128x128xbf16>, vector<16x128xf32> -> vector<16x128xf32>
    %10 = arith.addf %7, %9 : vector<16x128xf32>
    %c16_i32 = arith.constant 16 : i32
    %11 = arith.muli %arg1, %c16_i32 : i32
    %12 = tpu.iota {dimensions = array<i32: 0>} : vector<16x128xi32>
    %13 = vector.broadcast %11 : i32 to vector<16x128xi32>
    %14 = arith.addi %12, %13 : vector<16x128xi32>
    %c8_i32 = arith.constant 8 : i32
    %15 = vector.broadcast %c8_i32 : i32 to vector<16x128xi32>
    %16 = arith.cmpi slt, %14, %15 : vector<16x128xi32>
    %cst_10 = arith.constant 0.000000e+00 : f32
    %17 = vector.broadcast %cst_10 : f32 to vector<16x128xf32>
    %18 = arith.select %16, %10, %17 : vector<16x128xi1>, vector<16x128xf32>
    %19 = arith.truncf %18 : vector<16x128xf32> to vector<16x128xbf16>
    %c0_11 = arith.constant 0 : index
    %c0_12 = arith.constant 0 : index
    %c0_13 = arith.constant 0 : index
    %20 = vector.load %arg6[%c0_11, %c0_12, %c0_13] : memref<1x16x128xbf16, #tpu.memory_space<vmem>>, vector<1x16x128xbf16>
    %21 = vector.shape_cast %20 : vector<1x16x128xbf16> to vector<16x128xbf16>
    %22 = vector.shape_cast %19 : vector<16x128xbf16> to vector<1x16x128xbf16>
    tpu.vector_store %arg6[%c0_11, %c0_12, %c0_13], %22 {strides = array<i32>} : memref<1x16x128xbf16, #tpu.memory_space<vmem>>, vector<1x16x128xbf16>,
    %cst_14 = arith.constant dense<0.000000e+00> : vector<128xf32>
    %23 = vector.multi_reduction <add>, %18, %cst_14 [0] : vector<16x128xf32> to vector<128xf32>
    %24 = vector.shape_cast %23 : vector<128xf32> to vector<1x128xf32>
    %c0_15 = arith.constant 0 : index
    %c0_16 = arith.constant 0 : index
    %c0_17 = arith.constant 0 : index
    %c0_18 = arith.constant 0 : index
    %25 = vector.load %arg7[%c0_15, %c0_16, %c0_17, %c0_18] : memref<1x1x1x128xf32, #tpu.memory_space<vmem>>, vector<1x1x1x128xf32>
    %26 = vector.shape_cast %25 : vector<1x1x1x128xf32> to vector<1x128xf32>
    %27 = vector.shape_cast %24 : vector<1x128xf32> to vector<1x1x1x128xf32>
    tpu.vector_store %arg7[%c0_15, %c0_16, %c0_17, %c0_18], %27 {strides = array<i32>} : memref<1x1x1x128xf32, #tpu.memory_space<vmem>>, vector<1x1x1x128xf32>,
    %28 = arith.mulf %18, %18 : vector<16x128xf32>
    %cst_19 = arith.constant dense<0.000000e+00> : vector<128xf32>
    %29 = vector.multi_reduction <add>, %28, %cst_19 [0] : vector<16x128xf32> to vector<128xf32>
    %30 = vector.shape_cast %29 : vector<128xf32> to vector<1x128xf32>
    %c0_20 = arith.constant 0 : index
    %c0_21 = arith.constant 0 : index
    %c0_22 = arith.constant 0 : index
    %c0_23 = arith.constant 0 : index
    %31 = vector.load %arg8[%c0_20, %c0_21, %c0_22, %c0_23] : memref<1x1x1x128xf32, #tpu.memory_space<vmem>>, vector<1x1x1x128xf32>
    %32 = vector.shape_cast %31 : vector<1x1x1x128xf32> to vector<1x128xf32>
    %33 = vector.shape_cast %30 : vector<1x128xf32> to vector<1x1x1x128xf32>
    tpu.vector_store %arg8[%c0_20, %c0_21, %c0_22, %c0_23], %33 {strides = array<i32>} : memref<1x1x1x128xf32, #tpu.memory_space<vmem>>, vector<1x1x1x128xf32>,
    return
  }
  func.func @transform_0(%arg0: i32, %arg1: i32) -> (i32, i32, i32) {
    %c0_i32 = arith.constant 0 : i32
    %c0_i32_0 = arith.constant 0 : i32
    return %arg0, %arg1, %c0_i32 : i32, i32, i32
  }
  func.func @transform_1(%arg0: i32, %arg1: i32) -> (i32, i32, i32) {
    %c1_i32 = arith.constant 1 : i32
    %0 = arith.addi %arg1, %c1_i32 : i32
    %c1_i32_0 = arith.constant 1 : i32
    %1 = arith.muli %0, %c1_i32_0 : i32
    %c0_i32 = arith.constant 0 : i32
    %c0_i32_1 = arith.constant 0 : i32
    return %arg0, %1, %c0_i32 : i32, i32, i32
  }
  func.func @transform_2(%arg0: i32, %arg1: i32) -> (i32, i32) {
    %c0_i32 = arith.constant 0 : i32
    %c0_i32_0 = arith.constant 0 : i32
    %c0_i32_1 = arith.constant 0 : i32
    return %c0_i32, %c0_i32_0 : i32, i32
  }
  func.func @transform_3(%arg0: i32, %arg1: i32) -> (i32, i32) {
    %c0_i32 = arith.constant 0 : i32
    %c0_i32_0 = arith.constant 0 : i32
    %c0_i32_1 = arith.constant 0 : i32
    return %c0_i32, %c0_i32_0 : i32, i32
  }
  func.func @transform_4(%arg0: i32, %arg1: i32) -> (i32, i32, i32) {
    %c0_i32 = arith.constant 0 : i32
    %c0_i32_0 = arith.constant 0 : i32
    return %arg0, %arg1, %c0_i32 : i32, i32, i32
  }
  func.func @transform_5(%arg0: i32, %arg1: i32) -> (i32, i32, i32, i32) {
    %c0_i32 = arith.constant 0 : i32
    %c0_i32_0 = arith.constant 0 : i32
    %c0_i32_1 = arith.constant 0 : i32
    return %arg0, %arg1, %c0_i32, %c0_i32_0 : i32, i32, i32, i32
  }
  func.func @transform_6(%arg0: i32, %arg1: i32) -> (i32, i32, i32, i32) {
    %c0_i32 = arith.constant 0 : i32
    %c0_i32_0 = arith.constant 0 : i32
    %c0_i32_1 = arith.constant 0 : i32
    return %arg0, %arg1, %c0_i32, %c0_i32_0 : i32, i32, i32, i32
  }
}

module attributes {stable_mosaic.version = 11 : i64} {
  func.func @_conv_stats_kernel(%arg0: i32, %arg1: i32, %arg2: memref<1x16x256xbf16, #tpu.memory_space<vmem>>, %arg3: memref<1x16x256xbf16, #tpu.memory_space<vmem>>, %arg4: memref<256x128xbf16, #tpu.memory_space<vmem>>, %arg5: memref<128x128xbf16, #tpu.memory_space<vmem>>, %arg6: memref<1x16x128xbf16, #tpu.memory_space<vmem>>, %arg7: memref<1x1x1x128xf32, #tpu.memory_space<vmem>>, %arg8: memref<1x1x1x128xf32, #tpu.memory_space<vmem>>) attributes {dimension_semantics = [#tpu.dimension_semantics<parallel>, #tpu.dimension_semantics<parallel>], iteration_bounds = array<i64: 2, 1>, scalar_prefetch = 0 : i64, scratch_operands = 0 : i64, tpu.core_type = #tpu.core_type<tc>, window_params = [{transform_indices = @transform_0, window_bounds = array<i64: 1, 16, 256>}, {transform_indices = @transform_1, window_bounds = array<i64: 1, 16, 256>}, {pipeline_mode = #tpu.pipeline_mode<synchronous>, transform_indices = @transform_2, window_bounds = array<i64: 256, 128>}, {pipeline_mode = #tpu.pipeline_mode<synchronous>, transform_indices = @transform_3, window_bounds = array<i64: 128, 128>}, {transform_indices = @transform_4, window_bounds = array<i64: 1, 16, 128>}, {transform_indices = @transform_5, window_bounds = array<i64: 1, 1, 1, 128>}, {transform_indices = @transform_6, window_bounds = array<i64: 1, 1, 1, 128>}]} {
    %c0 = arith.constant 0 : index
    %c0_0 = arith.constant 0 : index
    %c0_1 = arith.constant 0 : index
    %0 = vector.load %arg2[%c0, %c0_0, %c0_1] : memref<1x16x256xbf16, #tpu.memory_space<vmem>>, vector<1x16x256xbf16>
    %1 = vector.shape_cast %0 : vector<1x16x256xbf16> to vector<16x256xbf16>
    %c0_2 = arith.constant 0 : index
    %c0_3 = arith.constant 0 : index
    %c0_4 = arith.constant 0 : index
    %2 = vector.load %arg3[%c0_2, %c0_3, %c0_4] : memref<1x16x256xbf16, #tpu.memory_space<vmem>>, vector<1x1x128xbf16>
    %3 = vector.shape_cast %2 : vector<1x1x128xbf16> to vector<1x128xbf16>
    %4 = vector.extract_strided_slice %1 {offsets = [1, 0], sizes = [15, 128], strides = [1, 1]} : vector<16x256xbf16> to vector<15x128xbf16>
    %5 = tpu.concatenate %4, %3 in 0 : vector<15x128xbf16>, vector<1x128xbf16> -> vector<16x128xbf16>
    %c0_5 = arith.constant 0 : index
    %c0_6 = arith.constant 0 : index
    %6 = vector.load %arg4[%c0_5, %c0_6] : memref<256x128xbf16, #tpu.memory_space<vmem>>, vector<256x128xbf16>
    %cst = arith.constant dense<0.000000e+00> : vector<16x128xf32>
    %7 = tpu.matmul %1, %6, %cst {dimension_numbers = #tpu.dot_dimension_numbers<[1], [0], [0], [1], [0, 0, 1, 1], [], []>} : vector<16x256xbf16>, vector<256x128xbf16>, vector<16x128xf32> -> vector<16x128xf32>
    %c0_7 = arith.constant 0 : index
    %c0_8 = arith.constant 0 : index
    %8 = vector.load %arg5[%c0_7, %c0_8] : memref<128x128xbf16, #tpu.memory_space<vmem>>, vector<128x128xbf16>
    %cst_9 = arith.constant dense<0.000000e+00> : vector<16x128xf32>
    %9 = tpu.matmul %5, %8, %cst_9 {dimension_numbers = #tpu.dot_dimension_numbers<[1], [0], [0], [1], [0, 0, 1, 1], [], []>} : vector<16x128xbf16>, vector<128x128xbf16>, vector<16x128xf32> -> vector<16x128xf32>
    %10 = arith.addf %7, %9 : vector<16x128xf32>
    %c16_i32 = arith.constant 16 : i32
    %11 = arith.muli %arg1, %c16_i32 : i32
    %12 = tpu.iota {dimensions = array<i32: 0>} : vector<16x128xi32>
    %13 = vector.broadcast %11 : i32 to vector<16x128xi32>
    %14 = arith.addi %12, %13 : vector<16x128xi32>
    %c4_i32 = arith.constant 4 : i32
    %15 = vector.broadcast %c4_i32 : i32 to vector<16x128xi32>
    %16 = arith.cmpi slt, %14, %15 : vector<16x128xi32>
    %cst_10 = arith.constant 0.000000e+00 : f32
    %17 = vector.broadcast %cst_10 : f32 to vector<16x128xf32>
    %18 = arith.select %16, %10, %17 : vector<16x128xi1>, vector<16x128xf32>
    %19 = arith.truncf %18 : vector<16x128xf32> to vector<16x128xbf16>
    %c0_11 = arith.constant 0 : index
    %c0_12 = arith.constant 0 : index
    %c0_13 = arith.constant 0 : index
    %20 = vector.load %arg6[%c0_11, %c0_12, %c0_13] : memref<1x16x128xbf16, #tpu.memory_space<vmem>>, vector<1x16x128xbf16>
    %21 = vector.shape_cast %20 : vector<1x16x128xbf16> to vector<16x128xbf16>
    %22 = vector.shape_cast %19 : vector<16x128xbf16> to vector<1x16x128xbf16>
    tpu.vector_store %arg6[%c0_11, %c0_12, %c0_13], %22 {strides = array<i32>} : memref<1x16x128xbf16, #tpu.memory_space<vmem>>, vector<1x16x128xbf16>,
    %cst_14 = arith.constant dense<0.000000e+00> : vector<128xf32>
    %23 = vector.multi_reduction <add>, %18, %cst_14 [0] : vector<16x128xf32> to vector<128xf32>
    %24 = vector.shape_cast %23 : vector<128xf32> to vector<1x128xf32>
    %c0_15 = arith.constant 0 : index
    %c0_16 = arith.constant 0 : index
    %c0_17 = arith.constant 0 : index
    %c0_18 = arith.constant 0 : index
    %25 = vector.load %arg7[%c0_15, %c0_16, %c0_17, %c0_18] : memref<1x1x1x128xf32, #tpu.memory_space<vmem>>, vector<1x1x1x128xf32>
    %26 = vector.shape_cast %25 : vector<1x1x1x128xf32> to vector<1x128xf32>
    %27 = vector.shape_cast %24 : vector<1x128xf32> to vector<1x1x1x128xf32>
    tpu.vector_store %arg7[%c0_15, %c0_16, %c0_17, %c0_18], %27 {strides = array<i32>} : memref<1x1x1x128xf32, #tpu.memory_space<vmem>>, vector<1x1x1x128xf32>,
    %28 = arith.mulf %18, %18 : vector<16x128xf32>
    %cst_19 = arith.constant dense<0.000000e+00> : vector<128xf32>
    %29 = vector.multi_reduction <add>, %28, %cst_19 [0] : vector<16x128xf32> to vector<128xf32>
    %30 = vector.shape_cast %29 : vector<128xf32> to vector<1x128xf32>
    %c0_20 = arith.constant 0 : index
    %c0_21 = arith.constant 0 : index
    %c0_22 = arith.constant 0 : index
    %c0_23 = arith.constant 0 : index
    %31 = vector.load %arg8[%c0_20, %c0_21, %c0_22, %c0_23] : memref<1x1x1x128xf32, #tpu.memory_space<vmem>>, vector<1x1x1x128xf32>
    %32 = vector.shape_cast %31 : vector<1x1x1x128xf32> to vector<1x128xf32>
    %33 = vector.shape_cast %30 : vector<1x128xf32> to vector<1x1x1x128xf32>
    tpu.vector_store %arg8[%c0_20, %c0_21, %c0_22, %c0_23], %33 {strides = array<i32>} : memref<1x1x1x128xf32, #tpu.memory_space<vmem>>, vector<1x1x1x128xf32>,
    return
  }
  func.func @transform_0(%arg0: i32, %arg1: i32) -> (i32, i32, i32) {
    %c0_i32 = arith.constant 0 : i32
    %c0_i32_0 = arith.constant 0 : i32
    return %arg0, %arg1, %c0_i32 : i32, i32, i32
  }
  func.func @transform_1(%arg0: i32, %arg1: i32) -> (i32, i32, i32) {
    %c1_i32 = arith.constant 1 : i32
    %0 = arith.addi %arg1, %c1_i32 : i32
    %c1_i32_0 = arith.constant 1 : i32
    %1 = arith.muli %0, %c1_i32_0 : i32
    %c0_i32 = arith.constant 0 : i32
    %c0_i32_1 = arith.constant 0 : i32
    return %arg0, %1, %c0_i32 : i32, i32, i32
  }
  func.func @transform_2(%arg0: i32, %arg1: i32) -> (i32, i32) {
    %c0_i32 = arith.constant 0 : i32
    %c0_i32_0 = arith.constant 0 : i32
    %c0_i32_1 = arith.constant 0 : i32
    return %c0_i32, %c0_i32_0 : i32, i32
  }
  func.func @transform_3(%arg0: i32, %arg1: i32) -> (i32, i32) {
    %c0_i32 = arith.constant 0 : i32
    %c0_i32_0 = arith.constant 0 : i32
    %c0_i32_1 = arith.constant 0 : i32
    return %c0_i32, %c0_i32_0 : i32, i32
  }
  func.func @transform_4(%arg0: i32, %arg1: i32) -> (i32, i32, i32) {
    %c0_i32 = arith.constant 0 : i32
    %c0_i32_0 = arith.constant 0 : i32
    return %arg0, %arg1, %c0_i32 : i32, i32, i32
  }
  func.func @transform_5(%arg0: i32, %arg1: i32) -> (i32, i32, i32, i32) {
    %c0_i32 = arith.constant 0 : i32
    %c0_i32_0 = arith.constant 0 : i32
    %c0_i32_1 = arith.constant 0 : i32
    return %arg0, %arg1, %c0_i32, %c0_i32_0 : i32, i32, i32, i32
  }
  func.func @transform_6(%arg0: i32, %arg1: i32) -> (i32, i32, i32, i32) {
    %c0_i32 = arith.constant 0 : i32
    %c0_i32_0 = arith.constant 0 : i32
    %c0_i32_1 = arith.constant 0 : i32
    return %arg0, %arg1, %c0_i32, %c0_i32_0 : i32, i32, i32, i32
  }
}

</mosaic_0001>

<llo_original>
// kernel: feature_extractor_forward.5
$region0: #{feature_extractor_forward.5}
  #allocation0 [shape = 'u32[]', space=smem, size = 0x4, offset = 0x4, fixed_abs, tag = 'smem constant byte address 0x4 - core index']
  #allocation1 [shape = 'u32[144,128]{1,0:T(1,128)}', space=vmem, size = 0x12000, scoped, tag = 'internal scratch']
  %s0 = inlined_call_operand.vmem [shape: bf16[2,16,128], index: 0, kind: input, shape index: {}]
  %s1 = inlined_call_operand.vmem [shape: f32[1,128], index: 1, kind: input, shape index: {}]
  %s2 = inlined_call_operand.vmem [shape: f32[1,128], index: 2, kind: input, shape index: {}]
  %s3 = inlined_call_operand.vmem [shape: f32[2,16,128], index: 3, kind: output, shape index: {}]
  %s4 = sld [smem:[#allocation0]]
  $region45: #{feature_extractor_forward.5} parent=0
    _
  %s6 = ssub.s32 1, %s4
  %s7 = scalar_select 0, %s6, %s4
  loop: start=0, step=1, limit=4
  $region2: #{feature_extractor_forward.5} parent=0 // loop_pre_header
    _
  $region3: #{feature_extractor_forward.5} parent=0 // loop_header
    %s9 = sphi 0, %s13
    %p10 = scmp.ge.s32.totalorder %s9, 4
    %s16 = sphi 0, %s28
    %s17 = sphi 0, %s24
    %s18 = sphi 0, %s16
    %s19 = sphi 0, %s17
    %s20 = sphi 0, %s18
    %s21 = sphi 0, %s19
    %s33 = sphi 0, %s35
    %s36 = sphi 0, %s33
    %s37 = sphi 0, %s36
    %s53 = sphi 0, %s37
    %s57 = sphi 0, %s57
    %s59 = sphi 0, %s57
    %s60 = sphi 0, %s59
    %s74 = sphi 0, %s60
    %s78 = sphi 0, %s78
    %s80 = sphi 0, %s78
    %s81 = sphi 0, %s80
    %s95 = sphi 0, %s81
    %s103 = sphi 0, %s105
    %s106 = sphi 0, %s103
    %s107 = sphi 0, %s106
    %s123 = sphi 0, %s107
  $region4: #{feature_extractor_forward.5} parent=0 // loop_header_branch
    %12 = sbr.rel (%p10) target = $region8
  $region5: #{feature_extractor_forward.5} parent=0 // loop_body
    %s14 = ssub.s32 %s9, 1
    %s15 = ssub.s32 %s9, 2
    %s22 = sadd.s32 1, %s17
    %p23 = scmp.ge.s32.totalorder %s22, 1
    %s24 = scalar_select %p23, 0, %s22
    %s25 = sadd.s32 1, %s16
    %s26 = scalar_select %p23, %s25, %s16
    %p27 = scmp.ge.s32.totalorder %s26, 2
    %s28 = scalar_select %p27, 0, %s26
    %s29 = ssub.s32 %s16, %s28
    %s30 = ssub.s32 %s17, %s24
    %s31 = sor.u32 %s29, %s30
    %p32 = scmp.eq.s32.totalorder %s31, 0
    %s34 = sadd.s32 %s33, 1
    %s35 = scalar_select %p32, %s33, %s34
    %p38 = pneg %p32
    %p39 = scmp.eq.s32.totalorder %s9, 1
    %p40 = por %p38, %p39
    %p41 = scmp.ne.s32.totalorder %s33, %s36
    %p42 = scmp.eq.s32.totalorder %s9, 0
    %p43 = por %p41, %p42
    %p44 = scmp.ne.s32.totalorder %s33, %s36
    %p45 = scmp.eq.s32.totalorder %s14, 1
    %p46 = por %p44, %p45
    %p47 = scmp.ne.s32.totalorder %s36, %s37
    %p48 = scmp.eq.s32.totalorder %s14, 0
    %p49 = por %p47, %p48
    %p50 = scmp.ne.s32.totalorder %s36, %s37
    %p51 = scmp.eq.s32.totalorder %s15, 1
    %p52 = por %p50, %p51
    %p54 = scmp.ne.s32.totalorder %s37, %s53
    %p55 = scmp.eq.s32.totalorder %s15, 0
    %p56 = por %p54, %p55
    %s58 = sadd.s32 %s57, 1
    %p61 = scmp.eq.s32.totalorder %s9, 1
    %p62 = scmp.ne.s32.totalorder %s57, %s59
    %p63 = scmp.eq.s32.totalorder %s9, 0
    %p64 = por %p62, %p63
    %p65 = scmp.ne.s32.totalorder %s57, %s59
    %p66 = scmp.eq.s32.totalorder %s14, 1
    %p67 = por %p65, %p66
    %p68 = scmp.ne.s32.totalorder %s59, %s60
    %p69 = scmp.eq.s32.totalorder %s14, 0
    %p70 = por %p68, %p69
    %p71 = scmp.ne.s32.totalorder %s59, %s60
    %p72 = scmp.eq.s32.totalorder %s15, 1
    %p73 = por %p71, %p72
    %p75 = scmp.ne.s32.totalorder %s60, %s74
    %p76 = scmp.eq.s32.totalorder %s15, 0
    %p77 = por %p75, %p76
    %s79 = sadd.s32 %s78, 1
    %p82 = scmp.eq.s32.totalorder %s9, 1
    %p83 = scmp.ne.s32.totalorder %s78, %s80
    %p84 = scmp.eq.s32.totalorder %s9, 0
    %p85 = por %p83, %p84
    %p86 = scmp.ne.s32.totalorder %s78, %s80
    %p87 = scmp.eq.s32.totalorder %s14, 1
    %p88 = por %p86, %p87
    %p89 = scmp.ne.s32.totalorder %s80, %s81
    %p90 = scmp.eq.s32.totalorder %s14, 0
    %p91 = por %p89, %p90
    %p92 = scmp.ne.s32.totalorder %s80, %s81
    %p93 = scmp.eq.s32.totalorder %s15, 1
    %p94 = por %p92, %p93
    %p96 = scmp.ne.s32.totalorder %s81, %s95
    %p97 = scmp.eq.s32.totalorder %s15, 0
    %p98 = por %p96, %p97
    %s99 = ssub.s32 %s16, %s28
    %s100 = ssub.s32 %s17, %s24
    %s101 = sor.u32 %s99, %s100
    %p102 = scmp.eq.s32.totalorder %s101, 0
    %s104 = sadd.s32 %s103, 1
    %s105 = scalar_select %p102, %s103, %s104
    %p108 = pneg %p102
    %p109 = scmp.eq.s32.totalorder %s9, 1
    %p110 = por %p108, %p109
    %p111 = scmp.ne.s32.totalorder %s103, %s106
    %p112 = scmp.eq.s32.totalorder %s9, 0
    %p113 = por %p111, %p112
    %p114 = scmp.ne.s32.totalorder %s103, %s106
    %p115 = scmp.eq.s32.totalorder %s14, 1
    %p116 = por %p114, %p115
    %p117 = scmp.ne.s32.totalorder %s106, %s107
    %p118 = scmp.eq.s32.totalorder %s14, 0
    %p119 = por %p117, %p118
    %p120 = scmp.ne.s32.totalorder %s106, %s107
    %p121 = scmp.eq.s32.totalorder %s15, 1
    %p122 = por %p120, %p121
    %p124 = scmp.ne.s32.totalorder %s107, %s123
    %p125 = scmp.eq.s32.totalorder %s15, 0
    %p126 = por %p124, %p125
    %p127 = scmp.le.s32.totalorder 1, %s9
    %p128 = scmp.lt.s32.totalorder %s9, 3
    %p129 = pnand %p127, %p128
    %p130 = pneg %p129
    // Predicated region
    $region9: #{feature_extractor_forward.5} parent=5 // pred_check
      _
    $region10: #{feature_extractor_forward.5} parent=5 // pred_check_branch
      %132 = sbr.rel (%p129) target = $region12
    $region11: #{feature_extractor_forward.5} parent=5 // pred_region
      %s133 = ssub.s32 %s9, 1
      // Predicated region
      $region13: #{feature_extractor_forward.5} parent=11 // pred_check
        %p134 = pneg %p70
      $region14: #{feature_extractor_forward.5} parent=11 // pred_check_branch
        %136 = sbr.rel (%p134) target = $region16
      $region15: #{feature_extractor_forward.5} parent=11 // pred_region
        _
      $region16: #{feature_extractor_forward.5} parent=11 // pred_fallthru
        _
      // Predicated region
      $region17: #{feature_extractor_forward.5} parent=11 // pred_check
        %p137 = pneg %p91
      $region18: #{feature_extractor_forward.5} parent=11 // pred_check_branch
        %139 = sbr.rel (%p137) target = $region20
      $region19: #{feature_extractor_forward.5} parent=11 // pred_region
        _
      $region20: #{feature_extractor_forward.5} parent=11 // pred_fallthru
        _
    $region12: #{feature_extractor_forward.5} parent=5 // pred_fallthru
      _
    %p140 = scmp.lt.s32.totalorder %s9, 2
    // Predicated region
    $region21: #{feature_extractor_forward.5} parent=5 // pred_check
      %p141 = pneg %p140
    $region22: #{feature_extractor_forward.5} parent=5 // pred_check_branch
      %143 = sbr.rel (%p141) target = $region24
    $region23: #{feature_extractor_forward.5} parent=5 // pred_region
      // Predicated region
      $region25: #{feature_extractor_forward.5} parent=23 // pred_check
        %p144 = pneg %p43
      $region26: #{feature_extractor_forward.5} parent=23 // pred_check_branch
        %146 = sbr.rel (%p144) target = $region28
      $region27: #{feature_extractor_forward.5} parent=23 // pred_region
        %s147 = smul.u32 2, %s17
        %p148 = scmp.lt.s32.totalorder %s16, 1
        %s149 = scalar_select %p148, %s16, 1
        %p150 = scmp.lt.s32.totalorder %s147, 1
        %s151 = scalar_select %p150, %s147, 1
        %s152 = smul.addr %s149, 2
        %s153 = sadd.s32 %s151, %s152
        %s154 = smul.addr %s153, 4
        %s155 = scalar_lea.vmem %s0, %s154
        %s156 = smul.u32 2, %s17
      $region28: #{feature_extractor_forward.5} parent=23 // pred_fallthru
        _
    $region24: #{feature_extractor_forward.5} parent=5 // pred_fallthru
      _
    %p157 = scmp.le.s32.totalorder 1, %s9
    %p158 = scmp.lt.s32.totalorder %s9, 3
    %p159 = pnand %p157, %p158
    %p160 = pneg %p159
    // Predicated region
    $region29: #{feature_extractor_forward.5} parent=5 // pred_check
      _
    $region30: #{feature_extractor_forward.5} parent=5 // pred_check_branch
      %162 = sbr.rel (%p159) target = $region32
    $region31: #{feature_extractor_forward.5} parent=5 // pred_region
      %s163 = ssub.s32 %s9, 1
      %s164 = smul.u32 2, %s19
      %p165 = scmp.lt.s32.totalorder %s18, 1
      %s166 = scalar_select %p165, %s18, 1
      %p167 = scmp.lt.s32.totalorder %s164, 1
      %s168 = scalar_select %p167, %s164, 1
      %s169 = smul.addr %s166, 2
      %s170 = sadd.s32 %s168, %s169
      %s171 = smul.addr %s170, 4
      %s172 = scalar_lea.vmem %s0, %s171
      %p173 = pneg %p49
      %p174 = pneg %p46
      %p175 = pneg %p70
      %p176 = pneg %p67
      %p177 = pneg %p91
      %p178 = pneg %p88
      %p179 = pneg %p119
      %p180 = pneg %p116
      %s181 = smul.u32 2, %s19
      %p182 = scmp.lt.s32.totalorder %s18, 1
      %s183 = scalar_select %p182, %s18, 1
      %p184 = scmp.lt.s32.totalorder %s181, 1
      %s185 = scalar_select %p184, %s181, 1
      %s186 = smul.addr %s183, 2
      %s187 = sadd.s32 %s185, %s186
      %s188 = smul.addr %s187, 8
      %s189 = scalar_lea.vmem %s3, %s188
      %s190 = smul.u32 2, %s19
      %p191 = scmp.lt.s32.totalorder %s18, 1
      %s192 = scalar_select %p191, %s18, 1
      %p193 = scmp.lt.s32.totalorder %s190, 1
      %s194 = scalar_select %p193, %s190, 1
      %s195 = smul.addr %s192, 2
      %s196 = sadd.s32 %s194, %s195
      %s197 = smul.addr %s196, 4
      %s198 = scalar_lea.vmem %s0, %s197
      %s199 = smul.u32 2, %s19
      %s200 = smul.u32 2, %s19
      %p201 = scmp.lt.s32.totalorder %s18, 1
      %s202 = scalar_select %p201, %s18, 1
      %p203 = scmp.lt.s32.totalorder %s200, 1
      %s204 = scalar_select %p203, %s200, 1
      %s205 = smul.addr %s202, 2
      %s206 = sadd.s32 %s204, %s205
      %s207 = smul.addr %s206, 8
      %s208 = scalar_lea.vmem %s3, %s207
      %s209 = smul.u32 2, %s19
      %v210 = vld [vmem:[%s198] sm:$0xf]
      %v211 = vld [vmem:[%s198 + $0x4] sm:$0xf]
      %v212 = vunpack.c.l.bf16 %v210
      %v213 = vunpack.c.l.bf16 %v211
      %v214 = vld [vmem:[%s1] sm:$0x1]
      %v216 = vlaneseq
      %v217 = vshrl.u32 %v216, 7
      %v218 = vsub.s32 0, %v217
      %v219 = vrot.slane %v214, %v218
      %v221 = vmul.f32 %v212, %v219
      %v222 = vmul.f32 %v213, %v219
      %v223 = vld [vmem:[%s2] sm:$0x1]
      %v225 = vlaneseq
      %v226 = vshrl.u32 %v225, 7
      %v227 = vsub.s32 0, %v226
      %v228 = vrot.slane %v223, %v227
      %v230 = vadd.f32 %v221, %v228
      %v231 = vadd.f32 %v222, %v228
      %v232 = vmax.f32 %v230, 0.0
      %v233 = vmax.f32 %v231, 0.0
      %234 = vst [vmem:[%s208] sm:$0xff] %v232
      %235 = vst [vmem:[%s208 + $0x8] sm:$0xff] %v233
      %s236 = smul.u32 2, %s19
      %p237 = scmp.lt.s32.totalorder %s18, 1
      %s238 = scalar_select %p237, %s18, 1
      %p239 = scmp.lt.s32.totalorder %s236, 1
      %s240 = scalar_select %p239, %s236, 1
      %s241 = smul.addr %s238, 2
      %s242 = sadd.s32 %s240, %s241
      %s243 = smul.addr %s242, 8
      %s244 = scalar_lea.vmem %s3, %s243
      // Predicated region
      $region33: #{feature_extractor_forward.5} parent=31 // pred_check
        %p245 = pneg %p116
      $region34: #{feature_extractor_forward.5} parent=31 // pred_check_branch
        %247 = sbr.rel (%p245) target = $region36
      $region35: #{feature_extractor_forward.5} parent=31 // pred_region
        %s248 = smul.u32 2, %s19
      $region36: #{feature_extractor_forward.5} parent=31 // pred_fallthru
        _
    $region32: #{feature_extractor_forward.5} parent=5 // pred_fallthru
      _
    %p249 = scmp.le.s32.totalorder 2, %s9
    // Predicated region
    $region37: #{feature_extractor_forward.5} parent=5 // pred_check
      %p250 = pneg %p249
    $region38: #{feature_extractor_forward.5} parent=5 // pred_check_branch
      %252 = sbr.rel (%p250) target = $region40
    $region39: #{feature_extractor_forward.5} parent=5 // pred_region
      %s253 = ssub.s32 %s9, 2
      // Predicated region
      $region41: #{feature_extractor_forward.5} parent=39 // pred_check
        %p254 = pneg %p122
      $region42: #{feature_extractor_forward.5} parent=39 // pred_check_branch
        %256 = sbr.rel (%p254) target = $region44
      $region43: #{feature_extractor_forward.5} parent=39 // pred_region
        %s257 = smul.u32 2, %s21
        %p258 = scmp.lt.s32.totalorder %s20, 1
        %s259 = scalar_select %p258, %s20, 1
        %p260 = scmp.lt.s32.totalorder %s257, 1
        %s261 = scalar_select %p260, %s257, 1
        %s262 = smul.addr %s259, 2
        %s263 = sadd.s32 %s261, %s262
        %s264 = smul.addr %s263, 8
        %s265 = scalar_lea.vmem %s3, %s264
      $region44: #{feature_extractor_forward.5} parent=39 // pred_fallthru
        _
    $region40: #{feature_extractor_forward.5} parent=5 // pred_fallthru
      _
  $region6: #{feature_extractor_forward.5} parent=0 // loop_footer
    %s13 = sadd.s32 1, %s9
  $region7: #{feature_extractor_forward.5} parent=0 // loop_footer_branch
    %8 = sbr.rel target = $region3
  $region8: #{feature_extractor_forward.5} parent=0 // loop_exit
    _

// kernel: feature_extractor_forward.3
$region0: #{feature_extractor_forward.3}
  #allocation0 [shape = 'u32[]', space=smem, size = 0x4, offset = 0x4, fixed_abs, tag = 'smem constant byte address 0x4 - core index']
  #allocation1 [shape = 'u32[144,128]{1,0:T(1,128)}', space=vmem, size = 0x12000, scoped, tag = 'internal scratch']
  %s0 = inlined_call_operand.vmem [shape: bf16[2,32,256], index: 0, kind: input, shape index: {}, may-alias: {0,1}]
  %s1 = inlined_call_operand.vmem [shape: bf16[2,32,256], index: 1, kind: input, shape index: {}, may-alias: {0,1}]
  %s2 = inlined_call_operand.vmem [shape: bf16[256,128], index: 2, kind: input, shape index: {}]
  %s3 = inlined_call_operand.vmem [shape: bf16[128,128], index: 3, kind: input, shape index: {}]
  %s4 = inlined_call_operand.vmem [shape: bf16[2,16,128], index: 4, kind: output, shape index: {0}]
  %s5 = inlined_call_operand.vmem [shape: f32[2,1,1,128], index: 5, kind: output, shape index: {1}]
  %s6 = inlined_call_operand.vmem [shape: f32[2,1,1,128], index: 6, kind: output, shape index: {2}]
  %7 = xla_tuple %s4, %s5, %s6
  %s8 = sld [smem:[#allocation0]]
  $region65: #{feature_extractor_forward.3} parent=0
    _
  %s10 = ssub.s32 1, %s8
  %s11 = scalar_select 0, %s10, %s8
  loop: start=0, step=1, limit=4
  $region2: #{feature_extractor_forward.3} parent=0 // loop_pre_header
    _
  $region3: #{feature_extractor_forward.3} parent=0 // loop_header
    %s13 = sphi 0, %s17
    %p14 = scmp.ge.s32.totalorder %s13, 4
    %s20 = sphi 0, %s32
    %s21 = sphi 0, %s28
    %s22 = sphi 0, %s20
    %s23 = sphi 0, %s21
    %s24 = sphi 0, %s22
    %s25 = sphi 0, %s23
    %s37 = sphi 0, %s39
    %s40 = sphi 0, %s37
    %s41 = sphi 0, %s40
    %s57 = sphi 0, %s41
    %s67 = sphi 0, %s69
    %s70 = sphi 0, %s67
    %s71 = sphi 0, %s70
    %s87 = sphi 0, %s71
    %s91 = sphi 0, %s91
    %s93 = sphi 0, %s91
    %s94 = sphi 0, %s93
    %s108 = sphi 0, %s94
    %s112 = sphi 0, %s112
    %s114 = sphi 0, %s112
    %s115 = sphi 0, %s114
    %s129 = sphi 0, %s115
    %s137 = sphi 0, %s139
    %s140 = sphi 0, %s137
    %s141 = sphi 0, %s140
    %s157 = sphi 0, %s141
    %s165 = sphi 0, %s167
    %s168 = sphi 0, %s165
    %s169 = sphi 0, %s168
    %s185 = sphi 0, %s169
    %s193 = sphi 0, %s195
    %s196 = sphi 0, %s193
    %s197 = sphi 0, %s196
    %s213 = sphi 0, %s197
  $region4: #{feature_extractor_forward.3} parent=0 // loop_header_branch
    %16 = sbr.rel (%p14) target = $region8
  $region5: #{feature_extractor_forward.3} parent=0 // loop_body
    %s18 = ssub.s32 %s13, 1
    %s19 = ssub.s32 %s13, 2
    %s26 = sadd.s32 1, %s21
    %p27 = scmp.ge.s32.totalorder %s26, 1
    %s28 = scalar_select %p27, 0, %s26
    %s29 = sadd.s32 1, %s20
    %s30 = scalar_select %p27, %s29, %s20
    %p31 = scmp.ge.s32.totalorder %s30, 2
    %s32 = scalar_select %p31, 0, %s30
    %s33 = ssub.s32 %s20, %s32
    %s34 = ssub.s32 %s21, %s28
    %s35 = sor.u32 %s33, %s34
    %p36 = scmp.eq.s32.totalorder %s35, 0
    %s38 = sadd.s32 %s37, 1
    %s39 = scalar_select %p36, %s37, %s38
    %p42 = pneg %p36
    %p43 = scmp.eq.s32.totalorder %s13, 1
    %p44 = por %p42, %p43
    %p45 = scmp.ne.s32.totalorder %s37, %s40
    %p46 = scmp.eq.s32.totalorder %s13, 0
    %p47 = por %p45, %p46
    %p48 = scmp.ne.s32.totalorder %s37, %s40
    %p49 = scmp.eq.s32.totalorder %s18, 1
    %p50 = por %p48, %p49
    %p51 = scmp.ne.s32.totalorder %s40, %s41
    %p52 = scmp.eq.s32.totalorder %s18, 0
    %p53 = por %p51, %p52
    %p54 = scmp.ne.s32.totalorder %s40, %s41
    %p55 = scmp.eq.s32.totalorder %s19, 1
    %p56 = por %p54, %p55
    %p58 = scmp.ne.s32.totalorder %s41, %s57
    %p59 = scmp.eq.s32.totalorder %s19, 0
    %p60 = por %p58, %p59
    %s61 = sadd.s32 %s21, 1
    %s62 = sadd.s32 %s28, 1
    %s63 = ssub.s32 %s20, %s32
    %s64 = ssub.s32 %s61, %s62
    %s65 = sor.u32 %s63, %s64
    %p66 = scmp.eq.s32.totalorder %s65, 0
    %s68 = sadd.s32 %s67, 1
    %s69 = scalar_select %p66, %s67, %s68
    %p72 = pneg %p66
    %p73 = scmp.eq.s32.totalorder %s13, 1
    %p74 = por %p72, %p73
    %p75 = scmp.ne.s32.totalorder %s67, %s70
    %p76 = scmp.eq.s32.totalorder %s13, 0
    %p77 = por %p75, %p76
    %p78 = scmp.ne.s32.totalorder %s67, %s70
    %p79 = scmp.eq.s32.totalorder %s18, 1
    %p80 = por %p78, %p79
    %p81 = scmp.ne.s32.totalorder %s70, %s71
    %p82 = scmp.eq.s32.totalorder %s18, 0
    %p83 = por %p81, %p82
    %p84 = scmp.ne.s32.totalorder %s70, %s71
    %p85 = scmp.eq.s32.totalorder %s19, 1
    %p86 = por %p84, %p85
    %p88 = scmp.ne.s32.totalorder %s71, %s87
    %p89 = scmp.eq.s32.totalorder %s19, 0
    %p90 = por %p88, %p89
    %s92 = sadd.s32 %s91, 1
    %p95 = scmp.eq.s32.totalorder %s13, 1
    %p96 = scmp.ne.s32.totalorder %s91, %s93
    %p97 = scmp.eq.s32.totalorder %s13, 0
    %p98 = por %p96, %p97
    %p99 = scmp.ne.s32.totalorder %s91, %s93
    %p100 = scmp.eq.s32.totalorder %s18, 1
    %p101 = por %p99, %p100
    %p102 = scmp.ne.s32.totalorder %s93, %s94
    %p103 = scmp.eq.s32.totalorder %s18, 0
    %p104 = por %p102, %p103
    %p105 = scmp.ne.s32.totalorder %s93, %s94
    %p106 = scmp.eq.s32.totalorder %s19, 1
    %p107 = por %p105, %p106
    %p109 = scmp.ne.s32.totalorder %s94, %s108
    %p110 = scmp.eq.s32.totalorder %s19, 0
    %p111 = por %p109, %p110
    %s113 = sadd.s32 %s112, 1
    %p116 = scmp.eq.s32.totalorder %s13, 1
    %p117 = scmp.ne.s32.totalorder %s112, %s114
    %p118 = scmp.eq.s32.totalorder %s13, 0
    %p119 = por %p117, %p118
    %p120 = scmp.ne.s32.totalorder %s112, %s114
    %p121 = scmp.eq.s32.totalorder %s18, 1
    %p122 = por %p120, %p121
    %p123 = scmp.ne.s32.totalorder %s114, %s115
    %p124 = scmp.eq.s32.totalorder %s18, 0
    %p125 = por %p123, %p124
    %p126 = scmp.ne.s32.totalorder %s114, %s115
    %p127 = scmp.eq.s32.totalorder %s19, 1
    %p128 = por %p126, %p127
    %p130 = scmp.ne.s32.totalorder %s115, %s129
    %p131 = scmp.eq.s32.totalorder %s19, 0
    %p132 = por %p130, %p131
    %s133 = ssub.s32 %s20, %s32
    %s134 = ssub.s32 %s21, %s28
    %s135 = sor.u32 %s133, %s134
    %p136 = scmp.eq.s32.totalorder %s135, 0
    %s138 = sadd.s32 %s137, 1
    %s139 = scalar_select %p136, %s137, %s138
    %p142 = pneg %p136
    %p143 = scmp.eq.s32.totalorder %s13, 1
    %p144 = por %p142, %p143
    %p145 = scmp.ne.s32.totalorder %s137, %s140
    %p146 = scmp.eq.s32.totalorder %s13, 0
    %p147 = por %p145, %p146
    %p148 = scmp.ne.s32.totalorder %s137, %s140
    %p149 = scmp.eq.s32.totalorder %s18, 1
    %p150 = por %p148, %p149
    %p151 = scmp.ne.s32.totalorder %s140, %s141
    %p152 = scmp.eq.s32.totalorder %s18, 0
    %p153 = por %p151, %p152
    %p154 = scmp.ne.s32.totalorder %s140, %s141
    %p155 = scmp.eq.s32.totalorder %s19, 1
    %p156 = por %p154, %p155
    %p158 = scmp.ne.s32.totalorder %s141, %s157
    %p159 = scmp.eq.s32.totalorder %s19, 0
    %p160 = por %p158, %p159
    %s161 = ssub.s32 %s20, %s32
    %s162 = ssub.s32 %s21, %s28
    %s163 = sor.u32 %s161, %s162
    %p164 = scmp.eq.s32.totalorder %s163, 0
    %s166 = sadd.s32 %s165, 1
    %s167 = scalar_select %p164, %s165, %s166
    %p170 = pneg %p164
    %p171 = scmp.eq.s32.totalorder %s13, 1
    %p172 = por %p170, %p171
    %p173 = scmp.ne.s32.totalorder %s165, %s168
    %p174 = scmp.eq.s32.totalorder %s13, 0
    %p175 = por %p173, %p174
    %p176 = scmp.ne.s32.totalorder %s165, %s168
    %p177 = scmp.eq.s32.totalorder %s18, 1
    %p178 = por %p176, %p177
    %p179 = scmp.ne.s32.totalorder %s168, %s169
    %p180 = scmp.eq.s32.totalorder %s18, 0
    %p181 = por %p179, %p180
    %p182 = scmp.ne.s32.totalorder %s168, %s169
    %p183 = scmp.eq.s32.totalorder %s19, 1
    %p184 = por %p182, %p183
    %p186 = scmp.ne.s32.totalorder %s169, %s185
    %p187 = scmp.eq.s32.totalorder %s19, 0
    %p188 = por %p186, %p187
    %s189 = ssub.s32 %s20, %s32
    %s190 = ssub.s32 %s21, %s28
    %s191 = sor.u32 %s189, %s190
    %p192 = scmp.eq.s32.totalorder %s191, 0
    %s194 = sadd.s32 %s193, 1
    %s195 = scalar_select %p192, %s193, %s194
    %p198 = pneg %p192
    %p199 = scmp.eq.s32.totalorder %s13, 1
    %p200 = por %p198, %p199
    %p201 = scmp.ne.s32.totalorder %s193, %s196
    %p202 = scmp.eq.s32.totalorder %s13, 0
    %p203 = por %p201, %p202
    %p204 = scmp.ne.s32.totalorder %s193, %s196
    %p205 = scmp.eq.s32.totalorder %s18, 1
    %p206 = por %p204, %p205
    %p207 = scmp.ne.s32.totalorder %s196, %s197
    %p208 = scmp.eq.s32.totalorder %s18, 0
    %p209 = por %p207, %p208
    %p210 = scmp.ne.s32.totalorder %s196, %s197
    %p211 = scmp.eq.s32.totalorder %s19, 1
    %p212 = por %p210, %p211
    %p214 = scmp.ne.s32.totalorder %s197, %s213
    %p215 = scmp.eq.s32.totalorder %s19, 0
    %p216 = por %p214, %p215
    %p217 = scmp.le.s32.totalorder 1, %s13
    %p218 = scmp.lt.s32.totalorder %s13, 3
    %p219 = pnand %p217, %p218
    %p220 = pneg %p219
    // Predicated region
    $region9: #{feature_extractor_forward.3} parent=5 // pred_check
      _
    $region10: #{feature_extractor_forward.3} parent=5 // pred_check_branch
      %222 = sbr.rel (%p219) target = $region12
    $region11: #{feature_extractor_forward.3} parent=5 // pred_region
      %s223 = ssub.s32 %s13, 1
      // Predicated region
      $region13: #{feature_extractor_forward.3} parent=11 // pred_check
        %p224 = pneg %p104
      $region14: #{feature_extractor_forward.3} parent=11 // pred_check_branch
        %226 = sbr.rel (%p224) target = $region16
      $region15: #{feature_extractor_forward.3} parent=11 // pred_region
        _
      $region16: #{feature_extractor_forward.3} parent=11 // pred_fallthru
        _
      // Predicated region
      $region17: #{feature_extractor_forward.3} parent=11 // pred_check
        %p227 = pneg %p125
      $region18: #{feature_extractor_forward.3} parent=11 // pred_check_branch
        %229 = sbr.rel (%p227) target = $region20
      $region19: #{feature_extractor_forward.3} parent=11 // pred_region
        _
      $region20: #{feature_extractor_forward.3} parent=11 // pred_fallthru
        _
    $region12: #{feature_extractor_forward.3} parent=5 // pred_fallthru
      _
    %p230 = scmp.lt.s32.totalorder %s13, 2
    // Predicated region
    $region21: #{feature_extractor_forward.3} parent=5 // pred_check
      %p231 = pneg %p230
    $region22: #{feature_extractor_forward.3} parent=5 // pred_check_branch
      %233 = sbr.rel (%p231) target = $region24
    $region23: #{feature_extractor_forward.3} parent=5 // pred_region
      // Predicated region
      $region25: #{feature_extractor_forward.3} parent=23 // pred_check
        %p234 = pneg %p47
      $region26: #{feature_extractor_forward.3} parent=23 // pred_check_branch
        %236 = sbr.rel (%p234) target = $region28
      $region27: #{feature_extractor_forward.3} parent=23 // pred_region
        %s237 = smul.u32 2, %s21
        %p238 = scmp.lt.s32.totalorder %s20, 1
        %s239 = scalar_select %p238, %s20, 1
        %p240 = scmp.lt.s32.totalorder %s237, 3
        %s241 = scalar_select %p240, %s237, 3
        %s242 = smul.addr %s241, 2
        %s243 = smul.addr %s239, 8
        %s244 = sadd.s32 %s242, %s243
        %s245 = smul.addr %s244, 4
        %s246 = scalar_lea.vmem %s0, %s245
        %s247 = smul.u32 2, %s21
      $region28: #{feature_extractor_forward.3} parent=23 // pred_fallthru
        _
      // Predicated region
      $region29: #{feature_extractor_forward.3} parent=23 // pred_check
        %p248 = pneg %p77
      $region30: #{feature_extractor_forward.3} parent=23 // pred_check_branch
        %250 = sbr.rel (%p248) target = $region32
      $region31: #{feature_extractor_forward.3} parent=23 // pred_region
        %s251 = sadd.s32 %s21, 1
        %s252 = smul.u32 2, %s251
        %p253 = scmp.lt.s32.totalorder %s20, 1
        %s254 = scalar_select %p253, %s20, 1
        %p255 = scmp.lt.s32.totalorder %s252, 3
        %s256 = scalar_select %p255, %s252, 3
        %s257 = smul.addr %s256, 2
        %s258 = smul.addr %s254, 8
        %s259 = sadd.s32 %s257, %s258
        %s260 = smul.addr %s259, 4
        %s261 = scalar_lea.vmem %s1, %s260
        %s262 = sadd.s32 %s21, 1
        %s263 = smul.u32 2, %s262
      $region32: #{feature_extractor_forward.3} parent=23 // pred_fallthru
        _
    $region24: #{feature_extractor_forward.3} parent=5 // pred_fallthru
      _
    %p264 = scmp.le.s32.totalorder 1, %s13
    %p265 = scmp.lt.s32.totalorder %s13, 3
    %p266 = pnand %p264, %p265
    %p267 = pneg %p266
    // Predicated region
    $region33: #{feature_extractor_forward.3} parent=5 // pred_check
      _
    $region34: #{feature_extractor_forward.3} parent=5 // pred_check_branch
      %269 = sbr.rel (%p266) target = $region36
    $region35: #{feature_extractor_forward.3} parent=5 // pred_region
      %s270 = ssub.s32 %s13, 1
      %s271 = smul.u32 2, %s23
      %p272 = scmp.lt.s32.totalorder %s22, 1
      %s273 = scalar_select %p272, %s22, 1
      %p274 = scmp.lt.s32.totalorder %s271, 3
      %s275 = scalar_select %p274, %s271, 3
      %s276 = smul.addr %s275, 2
      %s277 = smul.addr %s273, 8
      %s278 = sadd.s32 %s276, %s277
      %s279 = smul.addr %s278, 4
      %s280 = scalar_lea.vmem %s0, %s279
      %p281 = pneg %p53
      %p282 = pneg %p50
      %s283 = sadd.s32 %s23, 1
      %s284 = smul.u32 2, %s283
      %p285 = scmp.lt.s32.totalorder %s22, 1
      %s286 = scalar_select %p285, %s22, 1
      %p287 = scmp.lt.s32.totalorder %s284, 3
      %s288 = scalar_select %p287, %s284, 3
      %s289 = smul.addr %s288, 2
      %s290 = smul.addr %s286, 8
      %s291 = sadd.s32 %s289, %s290
      %s292 = smul.addr %s291, 4
      %s293 = scalar_lea.vmem %s1, %s292
      %p294 = pneg %p83
      %p295 = pneg %p80
      %p296 = pneg %p104
      %p297 = pneg %p101
      %p298 = pneg %p125
      %p299 = pneg %p122
      %p300 = pneg %p153
      %p301 = pneg %p150
      %s302 = smul.u32 2, %s23
      %p303 = scmp.lt.s32.totalorder %s22, 1
      %s304 = scalar_select %p303, %s22, 1
      %p305 = scmp.lt.s32.totalorder %s302, 1
      %s306 = scalar_select %p305, %s302, 1
      %s307 = smul.addr %s304, 2
      %s308 = sadd.s32 %s306, %s307
      %s309 = smul.addr %s308, 4
      %s310 = scalar_lea.vmem %s4, %s309
      %p311 = pneg %p181
      %p312 = pneg %p178
      %p313 = scmp.lt.s32.totalorder %s22, 1
      %s314 = scalar_select %p313, %s22, 1
      %p315 = scmp.lt.s32.totalorder %s23, 0
      %s316 = scalar_select %p315, %s23, 0
      %s317 = sadd.s32 %s316, %s314
      %s318 = scalar_lea.vmem %s5, %s317
      %p319 = pneg %p209
      %p320 = pneg %p206
      %p321 = scmp.lt.s32.totalorder %s22, 1
      %s322 = scalar_select %p321, %s22, 1
      %p323 = scmp.lt.s32.totalorder %s23, 0
      %s324 = scalar_select %p323, %s23, 0
      %s325 = sadd.s32 %s324, %s322
      %s326 = scalar_lea.vmem %s6, %s325
      %s327 = smul.u32 2, %s23
      %p328 = scmp.lt.s32.totalorder %s22, 1
      %s329 = scalar_select %p328, %s22, 1
      %p330 = scmp.lt.s32.totalorder %s327, 3
      %s331 = scalar_select %p330, %s327, 3
      %s332 = smul.addr %s331, 2
      %s333 = smul.addr %s329, 8
      %s334 = sadd.s32 %s332, %s333
      %s335 = smul.addr %s334, 4
      %s336 = scalar_lea.vmem %s0, %s335
      %s337 = smul.u32 2, %s23
      %s338 = sadd.s32 %s23, 1
      %s339 = smul.u32 2, %s338
      %p340 = scmp.lt.s32.totalorder %s22, 1
      %s341 = scalar_select %p340, %s22, 1
      %p342 = scmp.lt.s32.totalorder %s339, 3
      %s343 = scalar_select %p342, %s339, 3
      %s344 = smul.addr %s343, 2
      %s345 = smul.addr %s341, 8
      %s346 = sadd.s32 %s344, %s345
      %s347 = smul.addr %s346, 4
      %s348 = scalar_lea.vmem %s1, %s347
      %s349 = sadd.s32 %s23, 1
      %s350 = smul.u32 2, %s349
      %s351 = smul.u32 2, %s23
      %p352 = scmp.lt.s32.totalorder %s22, 1
      %s353 = scalar_select %p352, %s22, 1
      %p354 = scmp.lt.s32.totalorder %s351, 1
      %s355 = scalar_select %p354, %s351, 1
      %s356 = smul.addr %s353, 2
      %s357 = sadd.s32 %s355, %s356
      %s358 = smul.addr %s357, 4
      %s359 = scalar_lea.vmem %s4, %s358
      %s360 = smul.u32 2, %s23
      %p361 = scmp.lt.s32.totalorder %s22, 1
      %s362 = scalar_select %p361, %s22, 1
      %p363 = scmp.lt.s32.totalorder %s23, 0
      %s364 = scalar_select %p363, %s23, 0
      %s365 = sadd.s32 %s364, %s362
      %s366 = scalar_lea.vmem %s5, %s365
      %p367 = scmp.lt.s32.totalorder %s22, 1
      %s368 = scalar_select %p367, %s22, 1
      %p369 = scmp.lt.s32.totalorder %s23, 0
      %s370 = scalar_select %p369, %s23, 0
      %s371 = sadd.s32 %s370, %s368
      %s372 = scalar_lea.vmem %s6, %s371
      %v374 = vld [vmem:[%s336] sm:$0xff]
      %v375 = vld [vmem:[%s336 + $0x8] sm:$0xff]
      %v376 = vld [vmem:[%s348] sm:$0x1]
      %v379 = vunpack.c.l.b16 %v374
      %v380 = vunpack.c.l.b16 %v375
      %v381 = vpack.c.b16 %v380, %v379
      %v383 = vshrl.u32 %v381, 16
      %v385 = vshll.u32 %v381, 16
      %v387 = vrot.slane %v385, 1
      %v388 = vor.u32 %v383, %v387
      %v391 = vunpack.c.l.b16 %v376
      %v392 = vpack.c.b16 %v391, %v391
      %v394 = vshll.u32 %v392, 16
      %v396 = vrot.slane %v394, 1
      %vm398 = vcmask 1047552
      %vm399 = vsmask.f32 7424
      %vm400 = vmand %vm398, %vm399
      %v401 = vsel %vm400, %v388, %v396
      %v402 = vld [vmem:[%s2] sm:$0xf]
      %v403 = vld [vmem:[%s2 + $0x4] sm:$0xf]
      %v404 = vld [vmem:[%s2 + $0x8] sm:$0xf]
      %v405 = vld [vmem:[%s2 + $0xc] sm:$0xf]
      %v406 = vld [vmem:[%s2 + $0x10] sm:$0xf]
      %v407 = vld [vmem:[%s2 + $0x14] sm:$0xf]
      %v408 = vld [vmem:[%s2 + $0x18] sm:$0xf]
      %v409 = vld [vmem:[%s2 + $0x1c] sm:$0xf]
      %v410 = vld [vmem:[%s2 + $0x20] sm:$0xf]
      %v411 = vld [vmem:[%s2 + $0x24] sm:$0xf]
      %v412 = vld [vmem:[%s2 + $0x28] sm:$0xf]
      %v413 = vld [vmem:[%s2 + $0x2c] sm:$0xf]
      %v414 = vld [vmem:[%s2 + $0x30] sm:$0xf]
      %v415 = vld [vmem:[%s2 + $0x34] sm:$0xf]
      %v416 = vld [vmem:[%s2 + $0x38] sm:$0xf]
      %v417 = vld [vmem:[%s2 + $0x3c] sm:$0xf]
      %v418 = vld [vmem:[%s2 + $0x40] sm:$0xf]
      %v419 = vld [vmem:[%s2 + $0x44] sm:$0xf]
      %v420 = vld [vmem:[%s2 + $0x48] sm:$0xf]
      %v421 = vld [vmem:[%s2 + $0x4c] sm:$0xf]
      %v422 = vld [vmem:[%s2 + $0x50] sm:$0xf]
      %v423 = vld [vmem:[%s2 + $0x54] sm:$0xf]
      %v424 = vld [vmem:[%s2 + $0x58] sm:$0xf]
      %v425 = vld [vmem:[%s2 + $0x5c] sm:$0xf]
      %v426 = vld [vmem:[%s2 + $0x60] sm:$0xf]
      %v427 = vld [vmem:[%s2 + $0x64] sm:$0xf]
      %v428 = vld [vmem:[%s2 + $0x68] sm:$0xf]
      %v429 = vld [vmem:[%s2 + $0x6c] sm:$0xf]
      %v430 = vld [vmem:[%s2 + $0x70] sm:$0xf]
      %v431 = vld [vmem:[%s2 + $0x74] sm:$0xf]
      %v432 = vld [vmem:[%s2 + $0x78] sm:$0xf]
      %v433 = vld [vmem:[%s2 + $0x7c] sm:$0xf]
      %v434 = vld [vmem:[%s3] sm:$0xf]
      %v435 = vld [vmem:[%s3 + $0x4] sm:$0xf]
      %v436 = vld [vmem:[%s3 + $0x8] sm:$0xf]
      %v437 = vld [vmem:[%s3 + $0xc] sm:$0xf]
      %v438 = vld [vmem:[%s3 + $0x10] sm:$0xf]
      %v439 = vld [vmem:[%s3 + $0x14] sm:$0xf]
      %v440 = vld [vmem:[%s3 + $0x18] sm:$0xf]
      %v441 = vld [vmem:[%s3 + $0x1c] sm:$0xf]
      %v442 = vld [vmem:[%s3 + $0x20] sm:$0xf]
      %v443 = vld [vmem:[%s3 + $0x24] sm:$0xf]
      %v444 = vld [vmem:[%s3 + $0x28] sm:$0xf]
      %v445 = vld [vmem:[%s3 + $0x2c] sm:$0xf]
      %v446 = vld [vmem:[%s3 + $0x30] sm:$0xf]
      %v447 = vld [vmem:[%s3 + $0x34] sm:$0xf]
      %v448 = vld [vmem:[%s3 + $0x38] sm:$0xf]
      %v449 = vld [vmem:[%s3 + $0x3c] sm:$0xf]
      %v466 = vunpack.c.l.b16 %v434
      %v467 = vunpack.c.l.b16 %v435
      %v468 = vunpack.c.l.b16 %v436
      %v469 = vunpack.c.l.b16 %v437
      %v470 = vunpack.c.l.b16 %v438
      %v471 = vunpack.c.l.b16 %v439
      %v472 = vunpack.c.l.b16 %v440
      %v473 = vunpack.c.l.b16 %v441
      %v474 = vunpack.c.l.b16 %v442
      %v475 = vunpack.c.l.b16 %v443
      %v476 = vunpack.c.l.b16 %v444
      %v477 = vunpack.c.l.b16 %v445
      %v478 = vunpack.c.l.b16 %v446
      %v479 = vunpack.c.l.b16 %v447
      %v480 = vunpack.c.l.b16 %v448
      %v481 = vunpack.c.l.b16 %v449
      %v482 = vpack.c.b16 %v467, %v466
      %v483 = vpack.c.b16 %v469, %v468
      %v484 = vpack.c.b16 %v471, %v470
      %v485 = vpack.c.b16 %v473, %v472
      %v486 = vpack.c.b16 %v475, %v474
      %v487 = vpack.c.b16 %v477, %v476
      %v488 = vpack.c.b16 %v479, %v478
      %v489 = vpack.c.b16 %v481, %v480
      %498 = vmatprep.subr.bf16.mxu0 0
      %499 = vmatpush1.bf16.msra.mxu0 %v489
      %500 = vmatprep.subr.bf16.mxu0 0
      %501 = vmatpush1.bf16.msra.mxu0 %v488
      %502 = vmatprep.subr.bf16.mxu0 0
      %503 = vmatpush1.bf16.msra.mxu0 %v487
      %504 = vmatprep.subr.bf16.mxu0 0
      %505 = vmatpush1.bf16.msra.mxu0 %v486
      %506 = vmatprep.subr.bf16.mxu0 0
      %507 = vmatpush1.bf16.msra.mxu0 %v485
      %508 = vmatprep.subr.bf16.mxu0 0
      %509 = vmatpush1.bf16.msra.mxu0 %v484
      %510 = vmatprep.subr.bf16.mxu0 0
      %511 = vmatpush1.bf16.msra.mxu0 %v483
      %512 = vmatprep.subr.bf16.mxu0 0
      %513 = vmatpush1.bf16.msra.mxu0 %v482
      %514 = vmatprep.subr.bf16.mxu0 0
      %515 = vmatpush2.bf16.msra.mxu0 0
      %516 = vmatprep.subr.bf16.mxu0 0
      %517 = vmatpush2.bf16.msra.mxu0 0
      %518 = vmatprep.subr.bf16.mxu0 0
      %519 = vmatpush2.bf16.msra.mxu0 0
      %520 = vmatprep.subr.bf16.mxu0 0
      %521 = vmatpush2.bf16.msra.mxu0 0
      %522 = vmatprep.subr.bf16.mxu0 0
      %523 = vmatpush2.bf16.msra.mxu0 0
      %524 = vmatprep.subr.bf16.mxu0 0
      %525 = vmatpush2.bf16.msra.mxu0 0
      %526 = vmatprep.subr.bf16.mxu0 0
      %527 = vmatpush2.bf16.msra.mxu0 0
      %528 = vmatprep.subr.bf16.mxu0 0
      %529 = vmatpush2.bf16.msra.mxu0 0
      %530 = vmatprep.mubr.bf16.mxu0 0
      %531 = vmatmul.mubr.bf16.gmra.mxu0 %v401
      %v532 = vpop.f32.mrf.mxu0
      %v533 = vadd.f32 0.0, %v532
      %v534 = vpop.f32.mrf.mxu0
      %v535 = vpop.f32.mrf.mxu0
      %v536 = vadd.f32 0.0, %v535
      %v537 = vpop.f32.mrf.mxu0
      %538 = vdwg.mxu0
      %v539 = vunpack.c.h.b16 %v374
      %v540 = vunpack.c.h.b16 %v375
      %v541 = vpack.c.b16 %v540, %v539
      %v576 = vunpack.c.l.b16 %v402
      %v577 = vunpack.c.l.b16 %v403
      %v578 = vunpack.c.l.b16 %v404
      %v579 = vunpack.c.l.b16 %v405
      %v580 = vunpack.c.l.b16 %v406
      %v581 = vunpack.c.l.b16 %v407
      %v582 = vunpack.c.l.b16 %v408
      %v583 = vunpack.c.l.b16 %v409
      %v584 = vunpack.c.l.b16 %v410
      %v585 = vunpack.c.l.b16 %v411
      %v586 = vunpack.c.l.b16 %v412
      %v587 = vunpack.c.l.b16 %v413
      %v588 = vunpack.c.l.b16 %v414
      %v589 = vunpack.c.l.b16 %v415
      %v590 = vunpack.c.l.b16 %v416
      %v591 = vunpack.c.l.b16 %v417
      %v592 = vunpack.c.l.b16 %v418
      %v593 = vunpack.c.l.b16 %v419
      %v594 = vunpack.c.l.b16 %v420
      %v595 = vunpack.c.l.b16 %v421
      %v596 = vunpack.c.l.b16 %v422
      %v597 = vunpack.c.l.b16 %v423
      %v598 = vunpack.c.l.b16 %v424
      %v599 = vunpack.c.l.b16 %v425
      %v600 = vunpack.c.l.b16 %v426
      %v601 = vunpack.c.l.b16 %v427
      %v602 = vunpack.c.l.b16 %v428
      %v603 = vunpack.c.l.b16 %v429
      %v604 = vunpack.c.l.b16 %v430
      %v605 = vunpack.c.l.b16 %v431
      %v606 = vunpack.c.l.b16 %v432
      %v607 = vunpack.c.l.b16 %v433
      %v608 = vpack.c.b16 %v577, %v576
      %v609 = vpack.c.b16 %v579, %v578
      %v610 = vpack.c.b16 %v581, %v580
      %v611 = vpack.c.b16 %v583, %v582
      %v612 = vpack.c.b16 %v585, %v584
      %v613 = vpack.c.b16 %v587, %v586
      %v614 = vpack.c.b16 %v589, %v588
      %v615 = vpack.c.b16 %v591, %v590
      %v616 = vpack.c.b16 %v593, %v592
      %v617 = vpack.c.b16 %v595, %v594
      %v618 = vpack.c.b16 %v597, %v596
      %v619 = vpack.c.b16 %v599, %v598
      %v620 = vpack.c.b16 %v601, %v600
      %v621 = vpack.c.b16 %v603, %v602
      %v622 = vpack.c.b16 %v605, %v604
      %v623 = vpack.c.b16 %v607, %v606
      %640 = vmatprep.subr.bf16.mxu0 0
      %641 = vmatpush1.bf16.msra.mxu0 %v615
      %642 = vmatprep.subr.bf16.mxu0 0
      %643 = vmatpush1.bf16.msra.mxu0 %v614
      %644 = vmatprep.subr.bf16.mxu0 0
      %645 = vmatpush1.bf16.msra.mxu0 %v613
      %646 = vmatprep.subr.bf16.mxu0 0
      %647 = vmatpush1.bf16.msra.mxu0 %v612
      %648 = vmatprep.subr.bf16.mxu0 0
      %649 = vmatpush1.bf16.msra.mxu0 %v611
      %650 = vmatprep.subr.bf16.mxu0 0
      %651 = vmatpush1.bf16.msra.mxu0 %v610
      %652 = vmatprep.subr.bf16.mxu0 0
      %653 = vmatpush1.bf16.msra.mxu0 %v609
      %654 = vmatprep.subr.bf16.mxu0 0
      %655 = vmatpush1.bf16.msra.mxu0 %v608
      %656 = vmatprep.subr.bf16.mxu0 0
      %657 = vmatpush2.bf16.msra.mxu0 %v623
      %658 = vmatprep.subr.bf16.mxu0 0
      %659 = vmatpush2.bf16.msra.mxu0 %v622
      %660 = vmatprep.subr.bf16.mxu0 0
      %661 = vmatpush2.bf16.msra.mxu0 %v621
      %662 = vmatprep.subr.bf16.mxu0 0
      %663 = vmatpush2.bf16.msra.mxu0 %v620
      %664 = vmatprep.subr.bf16.mxu0 0
      %665 = vmatpush2.bf16.msra.mxu0 %v619
      %666 = vmatprep.subr.bf16.mxu0 0
      %667 = vmatpush2.bf16.msra.mxu0 %v618
      %668 = vmatprep.subr.bf16.mxu0 0
      %669 = vmatpush2.bf16.msra.mxu0 %v617
      %670 = vmatprep.subr.bf16.mxu0 0
      %671 = vmatpush2.bf16.msra.mxu0 %v616
      %672 = vmatprep.mubr.bf16.mxu0 %v541
      %673 = vmatmul.mubr.bf16.gmra.mxu0 %v381
      %v674 = vpop.f32.mrf.mxu0
      %v675 = vadd.f32 %v533, %v674
      %v676 = vpop.f32.mrf.mxu0
      %v677 = vpop.f32.mrf.mxu0
      %v678 = vadd.f32 %v536, %v677
      %v679 = vpop.f32.mrf.mxu0
      %680 = vdwg.mxu0
      %s681 = smul.u32 %s23, 16
      %v682 = vlaneseq
      %v683 = vshrl.u32 %v682, 7
      %v684 = vadd.s32 %v683, 8
      %v685 = vstv %s681
      %v686 = vadd.s32 %v683, %v685
      %v687 = vadd.s32 %v684, %v685
      %vm688 = vcmp.lt.s32.totalorder %v686, 8
      %vm689 = vcmp.lt.s32.totalorder %v687, 8
      %v690 = vsel %vm688, %v675, 0.0
      %v691 = vsel %vm689, %v678, 0.0
      %v692 = vpack.c.bf16 %v691, %v690
      %v694 = vunpack.c.l.b16 %v692
      %v695 = vunpack.c.h.b16 %v692
      %v696 = vpack.c.b16 %v694, %v694
      %v697 = vpack.c.b16 %v695, %v695
      %700 = vst [vmem:[%s359] sm:$0xf] %v696
      %701 = vst [vmem:[%s359 + $0x4] sm:$0xf] %v697
      %v702 = vadd.f32 %v690, %v691
      %v703 = vrot.slane %v702, 4
      %v704 = vadd.f32 %v702, %v703
      %v705 = vrot.slane %v704, 2
      %v706 = vadd.f32 %v704, %v705
      %v707 = vrot.slane %v706, 1
      %v708 = vadd.f32 %v706, %v707
      %709 = vst [vmem:[%s366] sm:$0x1] %v708
      %v710 = vmul.f32 %v690, %v690
      %v711 = vmul.f32 %v691, %v691
      %v712 = vadd.f32 %v710, %v711
      %v713 = vrot.slane %v712, 4
      %v714 = vadd.f32 %v712, %v713
      %v715 = vrot.slane %v714, 2
      %v716 = vadd.f32 %v714, %v715
      %v717 = vrot.slane %v716, 1
      %v718 = vadd.f32 %v716, %v717
      %719 = vst [vmem:[%s372] sm:$0x1] %v718
      %s720 = smul.u32 2, %s23
      %p721 = scmp.lt.s32.totalorder %s22, 1
      %s722 = scalar_select %p721, %s22, 1
      %p723 = scmp.lt.s32.totalorder %s720, 1
      %s724 = scalar_select %p723, %s720, 1
      %s725 = smul.addr %s722, 2
      %s726 = sadd.s32 %s724, %s725
      %s727 = smul.addr %s726, 4
      %s728 = scalar_lea.vmem %s4, %s727
      %p729 = scmp.lt.s32.totalorder %s22, 1
      %s730 = scalar_select %p729, %s22, 1
      %p731 = scmp.lt.s32.totalorder %s23, 0
      %s732 = scalar_select %p731, %s23, 0
      %s733 = sadd.s32 %s732, %s730
      %s734 = scalar_lea.vmem %s5, %s733
      %p735 = scmp.lt.s32.totalorder %s22, 1
      %s736 = scalar_select %p735, %s22, 1
      %p737 = scmp.lt.s32.totalorder %s23, 0
      %s738 = scalar_select %p737, %s23, 0
      %s739 = sadd.s32 %s738, %s736
      %s740 = scalar_lea.vmem %s6, %s739
      // Predicated region
      $region37: #{feature_extractor_forward.3} parent=35 // pred_check
        %p741 = pneg %p150
      $region38: #{feature_extractor_forward.3} parent=35 // pred_check_branch
        %743 = sbr.rel (%p741) target = $region40
      $region39: #{feature_extractor_forward.3} parent=35 // pred_region
        %s744 = smul.u32 2, %s23
      $region40: #{feature_extractor_forward.3} parent=35 // pred_fallthru
        _
      // Predicated region
      $region41: #{feature_extractor_forward.3} parent=35 // pred_check
        %p745 = pneg %p178
      $region42: #{feature_extractor_forward.3} parent=35 // pred_check_branch
        %747 = sbr.rel (%p745) target = $region44
      $region43: #{feature_extractor_forward.3} parent=35 // pred_region
        _
      $region44: #{feature_extractor_forward.3} parent=35 // pred_fallthru
        _
      // Predicated region
      $region45: #{feature_extractor_forward.3} parent=35 // pred_check
        %p748 = pneg %p206
      $region46: #{feature_extractor_forward.3} parent=35 // pred_check_branch
        %750 = sbr.rel (%p748) target = $region48
      $region47: #{feature_extractor_forward.3} parent=35 // pred_region
        _
      $region48: #{feature_extractor_forward.3} parent=35 // pred_fallthru
        _
    $region36: #{feature_extractor_forward.3} parent=5 // pred_fallthru
      _
    %p751 = scmp.le.s32.totalorder 2, %s13
    // Predicated region
    $region49: #{feature_extractor_forward.3} parent=5 // pred_check
      %p752 = pneg %p751
    $region50: #{feature_extractor_forward.3} parent=5 // pred_check_branch
      %754 = sbr.rel (%p752) target = $region52
    $region51: #{feature_extractor_forward.3} parent=5 // pred_region
      %s755 = ssub.s32 %s13, 2
      // Predicated region
      $region53: #{feature_extractor_forward.3} parent=51 // pred_check
        %p756 = pneg %p156
      $region54: #{feature_extractor_forward.3} parent=51 // pred_check_branch
        %758 = sbr.rel (%p756) target = $region56
      $region55: #{feature_extractor_forward.3} parent=51 // pred_region
        %s759 = smul.u32 2, %s25
        %p760 = scmp.lt.s32.totalorder %s24, 1
        %s761 = scalar_select %p760, %s24, 1
        %p762 = scmp.lt.s32.totalorder %s759, 1
        %s763 = scalar_select %p762, %s759, 1
        %s764 = smul.addr %s761, 2
        %s765 = sadd.s32 %s763, %s764
        %s766 = smul.addr %s765, 4
        %s767 = scalar_lea.vmem %s4, %s766
      $region56: #{feature_extractor_forward.3} parent=51 // pred_fallthru
        _
      // Predicated region
      $region57: #{feature_extractor_forward.3} parent=51 // pred_check
        %p768 = pneg %p184
      $region58: #{feature_extractor_forward.3} parent=51 // pred_check_branch
        %770 = sbr.rel (%p768) target = $region60
      $region59: #{feature_extractor_forward.3} parent=51 // pred_region
        %p771 = scmp.lt.s32.totalorder %s24, 1
        %s772 = scalar_select %p771, %s24, 1
        %p773 = scmp.lt.s32.totalorder %s25, 0
        %s774 = scalar_select %p773, %s25, 0
        %s775 = sadd.s32 %s774, %s772
        %s776 = scalar_lea.vmem %s5, %s775
      $region60: #{feature_extractor_forward.3} parent=51 // pred_fallthru
        _
      // Predicated region
      $region61: #{feature_extractor_forward.3} parent=51 // pred_check
        %p777 = pneg %p212
      $region62: #{feature_extractor_forward.3} parent=51 // pred_check_branch
        %779 = sbr.rel (%p777) target = $region64
      $region63: #{feature_extractor_forward.3} parent=51 // pred_region
        %p780 = scmp.lt.s32.totalorder %s24, 1
        %s781 = scalar_select %p780, %s24, 1
        %p782 = scmp.lt.s32.totalorder %s25, 0
        %s783 = scalar_select %p782, %s25, 0
        %s784 = sadd.s32 %s783, %s781
        %s785 = scalar_lea.vmem %s6, %s784
      $region64: #{feature_extractor_forward.3} parent=51 // pred_fallthru
        _
    $region52: #{feature_extractor_forward.3} parent=5 // pred_fallthru
      _
  $region6: #{feature_extractor_forward.3} parent=0 // loop_footer
    %s17 = sadd.s32 1, %s13
  $region7: #{feature_extractor_forward.3} parent=0 // loop_footer_branch
    %12 = sbr.rel target = $region3
  $region8: #{feature_extractor_forward.3} parent=0 // loop_exit
    _

// kernel: feature_extractor_forward.4
$region0: #{feature_extractor_forward.4}
  #allocation0 [shape = 'u32[]', space=smem, size = 0x4, offset = 0x4, fixed_abs, tag = 'smem constant byte address 0x4 - core index']
  #allocation1 [shape = 'u32[144,128]{1,0:T(1,128)}', space=vmem, size = 0x12000, scoped, tag = 'internal scratch']
  %s0 = inlined_call_operand.vmem [shape: bf16[2,32,256], index: 0, kind: input, shape index: {}, may-alias: {0,1}]
  %s1 = inlined_call_operand.vmem [shape: bf16[2,32,256], index: 1, kind: input, shape index: {}, may-alias: {0,1}]
  %s2 = inlined_call_operand.vmem [shape: bf16[256,128], index: 2, kind: input, shape index: {}]
  %s3 = inlined_call_operand.vmem [shape: bf16[128,128], index: 3, kind: input, shape index: {}]
  %s4 = inlined_call_operand.vmem [shape: bf16[2,16,128], index: 4, kind: output, shape index: {0}]
  %s5 = inlined_call_operand.vmem [shape: f32[2,1,1,128], index: 5, kind: output, shape index: {1}]
  %s6 = inlined_call_operand.vmem [shape: f32[2,1,1,128], index: 6, kind: output, shape index: {2}]
  %7 = xla_tuple %s4, %s5, %s6
  %s8 = sld [smem:[#allocation0]]
  $region65: #{feature_extractor_forward.4} parent=0
    _
  %s10 = ssub.s32 1, %s8
  %s11 = scalar_select 0, %s10, %s8
  loop: start=0, step=1, limit=4
  $region2: #{feature_extractor_forward.4} parent=0 // loop_pre_header
    _
  $region3: #{feature_extractor_forward.4} parent=0 // loop_header
    %s13 = sphi 0, %s17
    %p14 = scmp.ge.s32.totalorder %s13, 4
    %s20 = sphi 0, %s32
    %s21 = sphi 0, %s28
    %s22 = sphi 0, %s20
    %s23 = sphi 0, %s21
    %s24 = sphi 0, %s22
    %s25 = sphi 0, %s23
    %s37 = sphi 0, %s39
    %s40 = sphi 0, %s37
    %s41 = sphi 0, %s40
    %s57 = sphi 0, %s41
    %s67 = sphi 0, %s69
    %s70 = sphi 0, %s67
    %s71 = sphi 0, %s70
    %s87 = sphi 0, %s71
    %s91 = sphi 0, %s91
    %s93 = sphi 0, %s91
    %s94 = sphi 0, %s93
    %s108 = sphi 0, %s94
    %s112 = sphi 0, %s112
    %s114 = sphi 0, %s112
    %s115 = sphi 0, %s114
    %s129 = sphi 0, %s115
    %s137 = sphi 0, %s139
    %s140 = sphi 0, %s137
    %s141 = sphi 0, %s140
    %s157 = sphi 0, %s141
    %s165 = sphi 0, %s167
    %s168 = sphi 0, %s165
    %s169 = sphi 0, %s168
    %s185 = sphi 0, %s169
    %s193 = sphi 0, %s195
    %s196 = sphi 0, %s193
    %s197 = sphi 0, %s196
    %s213 = sphi 0, %s197
  $region4: #{feature_extractor_forward.4} parent=0 // loop_header_branch
    %16 = sbr.rel (%p14) target = $region8
  $region5: #{feature_extractor_forward.4} parent=0 // loop_body
    %s18 = ssub.s32 %s13, 1
    %s19 = ssub.s32 %s13, 2
    %s26 = sadd.s32 1, %s21
    %p27 = scmp.ge.s32.totalorder %s26, 1
    %s28 = scalar_select %p27, 0, %s26
    %s29 = sadd.s32 1, %s20
    %s30 = scalar_select %p27, %s29, %s20
    %p31 = scmp.ge.s32.totalorder %s30, 2
    %s32 = scalar_select %p31, 0, %s30
    %s33 = ssub.s32 %s20, %s32
    %s34 = ssub.s32 %s21, %s28
    %s35 = sor.u32 %s33, %s34
    %p36 = scmp.eq.s32.totalorder %s35, 0
    %s38 = sadd.s32 %s37, 1
    %s39 = scalar_select %p36, %s37, %s38
    %p42 = pneg %p36
    %p43 = scmp.eq.s32.totalorder %s13, 1
    %p44 = por %p42, %p43
    %p45 = scmp.ne.s32.totalorder %s37, %s40
    %p46 = scmp.eq.s32.totalorder %s13, 0
    %p47 = por %p45, %p46
    %p48 = scmp.ne.s32.totalorder %s37, %s40
    %p49 = scmp.eq.s32.totalorder %s18, 1
    %p50 = por %p48, %p49
    %p51 = scmp.ne.s32.totalorder %s40, %s41
    %p52 = scmp.eq.s32.totalorder %s18, 0
    %p53 = por %p51, %p52
    %p54 = scmp.ne.s32.totalorder %s40, %s41
    %p55 = scmp.eq.s32.totalorder %s19, 1
    %p56 = por %p54, %p55
    %p58 = scmp.ne.s32.totalorder %s41, %s57
    %p59 = scmp.eq.s32.totalorder %s19, 0
    %p60 = por %p58, %p59
    %s61 = sadd.s32 %s21, 1
    %s62 = sadd.s32 %s28, 1
    %s63 = ssub.s32 %s20, %s32
    %s64 = ssub.s32 %s61, %s62
    %s65 = sor.u32 %s63, %s64
    %p66 = scmp.eq.s32.totalorder %s65, 0
    %s68 = sadd.s32 %s67, 1
    %s69 = scalar_select %p66, %s67, %s68
    %p72 = pneg %p66
    %p73 = scmp.eq.s32.totalorder %s13, 1
    %p74 = por %p72, %p73
    %p75 = scmp.ne.s32.totalorder %s67, %s70
    %p76 = scmp.eq.s32.totalorder %s13, 0
    %p77 = por %p75, %p76
    %p78 = scmp.ne.s32.totalorder %s67, %s70
    %p79 = scmp.eq.s32.totalorder %s18, 1
    %p80 = por %p78, %p79
    %p81 = scmp.ne.s32.totalorder %s70, %s71
    %p82 = scmp.eq.s32.totalorder %s18, 0
    %p83 = por %p81, %p82
    %p84 = scmp.ne.s32.totalorder %s70, %s71
    %p85 = scmp.eq.s32.totalorder %s19, 1
    %p86 = por %p84, %p85
    %p88 = scmp.ne.s32.totalorder %s71, %s87
    %p89 = scmp.eq.s32.totalorder %s19, 0
    %p90 = por %p88, %p89
    %s92 = sadd.s32 %s91, 1
    %p95 = scmp.eq.s32.totalorder %s13, 1
    %p96 = scmp.ne.s32.totalorder %s91, %s93
    %p97 = scmp.eq.s32.totalorder %s13, 0
    %p98 = por %p96, %p97
    %p99 = scmp.ne.s32.totalorder %s91, %s93
    %p100 = scmp.eq.s32.totalorder %s18, 1
    %p101 = por %p99, %p100
    %p102 = scmp.ne.s32.totalorder %s93, %s94
    %p103 = scmp.eq.s32.totalorder %s18, 0
    %p104 = por %p102, %p103
    %p105 = scmp.ne.s32.totalorder %s93, %s94
    %p106 = scmp.eq.s32.totalorder %s19, 1
    %p107 = por %p105, %p106
    %p109 = scmp.ne.s32.totalorder %s94, %s108
    %p110 = scmp.eq.s32.totalorder %s19, 0
    %p111 = por %p109, %p110
    %s113 = sadd.s32 %s112, 1
    %p116 = scmp.eq.s32.totalorder %s13, 1
    %p117 = scmp.ne.s32.totalorder %s112, %s114
    %p118 = scmp.eq.s32.totalorder %s13, 0
    %p119 = por %p117, %p118
    %p120 = scmp.ne.s32.totalorder %s112, %s114
    %p121 = scmp.eq.s32.totalorder %s18, 1
    %p122 = por %p120, %p121
    %p123 = scmp.ne.s32.totalorder %s114, %s115
    %p124 = scmp.eq.s32.totalorder %s18, 0
    %p125 = por %p123, %p124
    %p126 = scmp.ne.s32.totalorder %s114, %s115
    %p127 = scmp.eq.s32.totalorder %s19, 1
    %p128 = por %p126, %p127
    %p130 = scmp.ne.s32.totalorder %s115, %s129
    %p131 = scmp.eq.s32.totalorder %s19, 0
    %p132 = por %p130, %p131
    %s133 = ssub.s32 %s20, %s32
    %s134 = ssub.s32 %s21, %s28
    %s135 = sor.u32 %s133, %s134
    %p136 = scmp.eq.s32.totalorder %s135, 0
    %s138 = sadd.s32 %s137, 1
    %s139 = scalar_select %p136, %s137, %s138
    %p142 = pneg %p136
    %p143 = scmp.eq.s32.totalorder %s13, 1
    %p144 = por %p142, %p143
    %p145 = scmp.ne.s32.totalorder %s137, %s140
    %p146 = scmp.eq.s32.totalorder %s13, 0
    %p147 = por %p145, %p146
    %p148 = scmp.ne.s32.totalorder %s137, %s140
    %p149 = scmp.eq.s32.totalorder %s18, 1
    %p150 = por %p148, %p149
    %p151 = scmp.ne.s32.totalorder %s140, %s141
    %p152 = scmp.eq.s32.totalorder %s18, 0
    %p153 = por %p151, %p152
    %p154 = scmp.ne.s32.totalorder %s140, %s141
    %p155 = scmp.eq.s32.totalorder %s19, 1
    %p156 = por %p154, %p155
    %p158 = scmp.ne.s32.totalorder %s141, %s157
    %p159 = scmp.eq.s32.totalorder %s19, 0
    %p160 = por %p158, %p159
    %s161 = ssub.s32 %s20, %s32
    %s162 = ssub.s32 %s21, %s28
    %s163 = sor.u32 %s161, %s162
    %p164 = scmp.eq.s32.totalorder %s163, 0
    %s166 = sadd.s32 %s165, 1
    %s167 = scalar_select %p164, %s165, %s166
    %p170 = pneg %p164
    %p171 = scmp.eq.s32.totalorder %s13, 1
    %p172 = por %p170, %p171
    %p173 = scmp.ne.s32.totalorder %s165, %s168
    %p174 = scmp.eq.s32.totalorder %s13, 0
    %p175 = por %p173, %p174
    %p176 = scmp.ne.s32.totalorder %s165, %s168
    %p177 = scmp.eq.s32.totalorder %s18, 1
    %p178 = por %p176, %p177
    %p179 = scmp.ne.s32.totalorder %s168, %s169
    %p180 = scmp.eq.s32.totalorder %s18, 0
    %p181 = por %p179, %p180
    %p182 = scmp.ne.s32.totalorder %s168, %s169
    %p183 = scmp.eq.s32.totalorder %s19, 1
    %p184 = por %p182, %p183
    %p186 = scmp.ne.s32.totalorder %s169, %s185
    %p187 = scmp.eq.s32.totalorder %s19, 0
    %p188 = por %p186, %p187
    %s189 = ssub.s32 %s20, %s32
    %s190 = ssub.s32 %s21, %s28
    %s191 = sor.u32 %s189, %s190
    %p192 = scmp.eq.s32.totalorder %s191, 0
    %s194 = sadd.s32 %s193, 1
    %s195 = scalar_select %p192, %s193, %s194
    %p198 = pneg %p192
    %p199 = scmp.eq.s32.totalorder %s13, 1
    %p200 = por %p198, %p199
    %p201 = scmp.ne.s32.totalorder %s193, %s196
    %p202 = scmp.eq.s32.totalorder %s13, 0
    %p203 = por %p201, %p202
    %p204 = scmp.ne.s32.totalorder %s193, %s196
    %p205 = scmp.eq.s32.totalorder %s18, 1
    %p206 = por %p204, %p205
    %p207 = scmp.ne.s32.totalorder %s196, %s197
    %p208 = scmp.eq.s32.totalorder %s18, 0
    %p209 = por %p207, %p208
    %p210 = scmp.ne.s32.totalorder %s196, %s197
    %p211 = scmp.eq.s32.totalorder %s19, 1
    %p212 = por %p210, %p211
    %p214 = scmp.ne.s32.totalorder %s197, %s213
    %p215 = scmp.eq.s32.totalorder %s19, 0
    %p216 = por %p214, %p215
    %p217 = scmp.le.s32.totalorder 1, %s13
    %p218 = scmp.lt.s32.totalorder %s13, 3
    %p219 = pnand %p217, %p218
    %p220 = pneg %p219
    // Predicated region
    $region9: #{feature_extractor_forward.4} parent=5 // pred_check
      _
    $region10: #{feature_extractor_forward.4} parent=5 // pred_check_branch
      %222 = sbr.rel (%p219) target = $region12
    $region11: #{feature_extractor_forward.4} parent=5 // pred_region
      %s223 = ssub.s32 %s13, 1
      // Predicated region
      $region13: #{feature_extractor_forward.4} parent=11 // pred_check
        %p224 = pneg %p104
      $region14: #{feature_extractor_forward.4} parent=11 // pred_check_branch
        %226 = sbr.rel (%p224) target = $region16
      $region15: #{feature_extractor_forward.4} parent=11 // pred_region
        _
      $region16: #{feature_extractor_forward.4} parent=11 // pred_fallthru
        _
      // Predicated region
      $region17: #{feature_extractor_forward.4} parent=11 // pred_check
        %p227 = pneg %p125
      $region18: #{feature_extractor_forward.4} parent=11 // pred_check_branch
        %229 = sbr.rel (%p227) target = $region20
      $region19: #{feature_extractor_forward.4} parent=11 // pred_region
        _
      $region20: #{feature_extractor_forward.4} parent=11 // pred_fallthru
        _
    $region12: #{feature_extractor_forward.4} parent=5 // pred_fallthru
      _
    %p230 = scmp.lt.s32.totalorder %s13, 2
    // Predicated region
    $region21: #{feature_extractor_forward.4} parent=5 // pred_check
      %p231 = pneg %p230
    $region22: #{feature_extractor_forward.4} parent=5 // pred_check_branch
      %233 = sbr.rel (%p231) target = $region24
    $region23: #{feature_extractor_forward.4} parent=5 // pred_region
      // Predicated region
      $region25: #{feature_extractor_forward.4} parent=23 // pred_check
        %p234 = pneg %p47
      $region26: #{feature_extractor_forward.4} parent=23 // pred_check_branch
        %236 = sbr.rel (%p234) target = $region28
      $region27: #{feature_extractor_forward.4} parent=23 // pred_region
        %s237 = smul.u32 2, %s21
        %p238 = scmp.lt.s32.totalorder %s20, 1
        %s239 = scalar_select %p238, %s20, 1
        %p240 = scmp.lt.s32.totalorder %s237, 3
        %s241 = scalar_select %p240, %s237, 3
        %s242 = smul.addr %s241, 2
        %s243 = smul.addr %s239, 8
        %s244 = sadd.s32 %s242, %s243
        %s245 = smul.addr %s244, 4
        %s246 = scalar_lea.vmem %s0, %s245
        %s247 = smul.u32 2, %s21
      $region28: #{feature_extractor_forward.4} parent=23 // pred_fallthru
        _
      // Predicated region
      $region29: #{feature_extractor_forward.4} parent=23 // pred_check
        %p248 = pneg %p77
      $region30: #{feature_extractor_forward.4} parent=23 // pred_check_branch
        %250 = sbr.rel (%p248) target = $region32
      $region31: #{feature_extractor_forward.4} parent=23 // pred_region
        %s251 = sadd.s32 %s21, 1
        %s252 = smul.u32 2, %s251
        %p253 = scmp.lt.s32.totalorder %s20, 1
        %s254 = scalar_select %p253, %s20, 1
        %p255 = scmp.lt.s32.totalorder %s252, 3
        %s256 = scalar_select %p255, %s252, 3
        %s257 = smul.addr %s256, 2
        %s258 = smul.addr %s254, 8
        %s259 = sadd.s32 %s257, %s258
        %s260 = smul.addr %s259, 4
        %s261 = scalar_lea.vmem %s1, %s260
        %s262 = sadd.s32 %s21, 1
        %s263 = smul.u32 2, %s262
      $region32: #{feature_extractor_forward.4} parent=23 // pred_fallthru
        _
    $region24: #{feature_extractor_forward.4} parent=5 // pred_fallthru
      _
    %p264 = scmp.le.s32.totalorder 1, %s13
    %p265 = scmp.lt.s32.totalorder %s13, 3
    %p266 = pnand %p264, %p265
    %p267 = pneg %p266
    // Predicated region
    $region33: #{feature_extractor_forward.4} parent=5 // pred_check
      _
    $region34: #{feature_extractor_forward.4} parent=5 // pred_check_branch
      %269 = sbr.rel (%p266) target = $region36
    $region35: #{feature_extractor_forward.4} parent=5 // pred_region
      %s270 = ssub.s32 %s13, 1
      %s271 = smul.u32 2, %s23
      %p272 = scmp.lt.s32.totalorder %s22, 1
      %s273 = scalar_select %p272, %s22, 1
      %p274 = scmp.lt.s32.totalorder %s271, 3
      %s275 = scalar_select %p274, %s271, 3
      %s276 = smul.addr %s275, 2
      %s277 = smul.addr %s273, 8
      %s278 = sadd.s32 %s276, %s277
      %s279 = smul.addr %s278, 4
      %s280 = scalar_lea.vmem %s0, %s279
      %p281 = pneg %p53
      %p282 = pneg %p50
      %s283 = sadd.s32 %s23, 1
      %s284 = smul.u32 2, %s283
      %p285 = scmp.lt.s32.totalorder %s22, 1
      %s286 = scalar_select %p285, %s22, 1
      %p287 = scmp.lt.s32.totalorder %s284, 3
      %s288 = scalar_select %p287, %s284, 3
      %s289 = smul.addr %s288, 2
      %s290 = smul.addr %s286, 8
      %s291 = sadd.s32 %s289, %s290
      %s292 = smul.addr %s291, 4
      %s293 = scalar_lea.vmem %s1, %s292
      %p294 = pneg %p83
      %p295 = pneg %p80
      %p296 = pneg %p104
      %p297 = pneg %p101
      %p298 = pneg %p125
      %p299 = pneg %p122
      %p300 = pneg %p153
      %p301 = pneg %p150
      %s302 = smul.u32 2, %s23
      %p303 = scmp.lt.s32.totalorder %s22, 1
      %s304 = scalar_select %p303, %s22, 1
      %p305 = scmp.lt.s32.totalorder %s302, 1
      %s306 = scalar_select %p305, %s302, 1
      %s307 = smul.addr %s304, 2
      %s308 = sadd.s32 %s306, %s307
      %s309 = smul.addr %s308, 4
      %s310 = scalar_lea.vmem %s4, %s309
      %p311 = pneg %p181
      %p312 = pneg %p178
      %p313 = scmp.lt.s32.totalorder %s22, 1
      %s314 = scalar_select %p313, %s22, 1
      %p315 = scmp.lt.s32.totalorder %s23, 0
      %s316 = scalar_select %p315, %s23, 0
      %s317 = sadd.s32 %s316, %s314
      %s318 = scalar_lea.vmem %s5, %s317
      %p319 = pneg %p209
      %p320 = pneg %p206
      %p321 = scmp.lt.s32.totalorder %s22, 1
      %s322 = scalar_select %p321, %s22, 1
      %p323 = scmp.lt.s32.totalorder %s23, 0
      %s324 = scalar_select %p323, %s23, 0
      %s325 = sadd.s32 %s324, %s322
      %s326 = scalar_lea.vmem %s6, %s325
      %s327 = smul.u32 2, %s23
      %p328 = scmp.lt.s32.totalorder %s22, 1
      %s329 = scalar_select %p328, %s22, 1
      %p330 = scmp.lt.s32.totalorder %s327, 3
      %s331 = scalar_select %p330, %s327, 3
      %s332 = smul.addr %s331, 2
      %s333 = smul.addr %s329, 8
      %s334 = sadd.s32 %s332, %s333
      %s335 = smul.addr %s334, 4
      %s336 = scalar_lea.vmem %s0, %s335
      %s337 = smul.u32 2, %s23
      %s338 = sadd.s32 %s23, 1
      %s339 = smul.u32 2, %s338
      %p340 = scmp.lt.s32.totalorder %s22, 1
      %s341 = scalar_select %p340, %s22, 1
      %p342 = scmp.lt.s32.totalorder %s339, 3
      %s343 = scalar_select %p342, %s339, 3
      %s344 = smul.addr %s343, 2
      %s345 = smul.addr %s341, 8
      %s346 = sadd.s32 %s344, %s345
      %s347 = smul.addr %s346, 4
      %s348 = scalar_lea.vmem %s1, %s347
      %s349 = sadd.s32 %s23, 1
      %s350 = smul.u32 2, %s349
      %s351 = smul.u32 2, %s23
      %p352 = scmp.lt.s32.totalorder %s22, 1
      %s353 = scalar_select %p352, %s22, 1
      %p354 = scmp.lt.s32.totalorder %s351, 1
      %s355 = scalar_select %p354, %s351, 1
      %s356 = smul.addr %s353, 2
      %s357 = sadd.s32 %s355, %s356
      %s358 = smul.addr %s357, 4
      %s359 = scalar_lea.vmem %s4, %s358
      %s360 = smul.u32 2, %s23
      %p361 = scmp.lt.s32.totalorder %s22, 1
      %s362 = scalar_select %p361, %s22, 1
      %p363 = scmp.lt.s32.totalorder %s23, 0
      %s364 = scalar_select %p363, %s23, 0
      %s365 = sadd.s32 %s364, %s362
      %s366 = scalar_lea.vmem %s5, %s365
      %p367 = scmp.lt.s32.totalorder %s22, 1
      %s368 = scalar_select %p367, %s22, 1
      %p369 = scmp.lt.s32.totalorder %s23, 0
      %s370 = scalar_select %p369, %s23, 0
      %s371 = sadd.s32 %s370, %s368
      %s372 = scalar_lea.vmem %s6, %s371
      %v374 = vld [vmem:[%s336] sm:$0xff]
      %v375 = vld [vmem:[%s336 + $0x8] sm:$0xff]
      %v376 = vld [vmem:[%s348] sm:$0x1]
      %v379 = vunpack.c.l.b16 %v374
      %v380 = vunpack.c.l.b16 %v375
      %v381 = vpack.c.b16 %v380, %v379
      %v383 = vshrl.u32 %v381, 16
      %v385 = vshll.u32 %v381, 16
      %v387 = vrot.slane %v385, 1
      %v388 = vor.u32 %v383, %v387
      %v391 = vunpack.c.l.b16 %v376
      %v392 = vpack.c.b16 %v391, %v391
      %v394 = vshll.u32 %v392, 16
      %v396 = vrot.slane %v394, 1
      %vm398 = vcmask 1047552
      %vm399 = vsmask.f32 7424
      %vm400 = vmand %vm398, %vm399
      %v401 = vsel %vm400, %v388, %v396
      %v402 = vld [vmem:[%s2] sm:$0xf]
      %v403 = vld [vmem:[%s2 + $0x4] sm:$0xf]
      %v404 = vld [vmem:[%s2 + $0x8] sm:$0xf]
      %v405 = vld [vmem:[%s2 + $0xc] sm:$0xf]
      %v406 = vld [vmem:[%s2 + $0x10] sm:$0xf]
      %v407 = vld [vmem:[%s2 + $0x14] sm:$0xf]
      %v408 = vld [vmem:[%s2 + $0x18] sm:$0xf]
      %v409 = vld [vmem:[%s2 + $0x1c] sm:$0xf]
      %v410 = vld [vmem:[%s2 + $0x20] sm:$0xf]
      %v411 = vld [vmem:[%s2 + $0x24] sm:$0xf]
      %v412 = vld [vmem:[%s2 + $0x28] sm:$0xf]
      %v413 = vld [vmem:[%s2 + $0x2c] sm:$0xf]
      %v414 = vld [vmem:[%s2 + $0x30] sm:$0xf]
      %v415 = vld [vmem:[%s2 + $0x34] sm:$0xf]
      %v416 = vld [vmem:[%s2 + $0x38] sm:$0xf]
      %v417 = vld [vmem:[%s2 + $0x3c] sm:$0xf]
      %v418 = vld [vmem:[%s2 + $0x40] sm:$0xf]
      %v419 = vld [vmem:[%s2 + $0x44] sm:$0xf]
      %v420 = vld [vmem:[%s2 + $0x48] sm:$0xf]
      %v421 = vld [vmem:[%s2 + $0x4c] sm:$0xf]
      %v422 = vld [vmem:[%s2 + $0x50] sm:$0xf]
      %v423 = vld [vmem:[%s2 + $0x54] sm:$0xf]
      %v424 = vld [vmem:[%s2 + $0x58] sm:$0xf]
      %v425 = vld [vmem:[%s2 + $0x5c] sm:$0xf]
      %v426 = vld [vmem:[%s2 + $0x60] sm:$0xf]
      %v427 = vld [vmem:[%s2 + $0x64] sm:$0xf]
      %v428 = vld [vmem:[%s2 + $0x68] sm:$0xf]
      %v429 = vld [vmem:[%s2 + $0x6c] sm:$0xf]
      %v430 = vld [vmem:[%s2 + $0x70] sm:$0xf]
      %v431 = vld [vmem:[%s2 + $0x74] sm:$0xf]
      %v432 = vld [vmem:[%s2 + $0x78] sm:$0xf]
      %v433 = vld [vmem:[%s2 + $0x7c] sm:$0xf]
      %v434 = vld [vmem:[%s3] sm:$0xf]
      %v435 = vld [vmem:[%s3 + $0x4] sm:$0xf]
      %v436 = vld [vmem:[%s3 + $0x8] sm:$0xf]
      %v437 = vld [vmem:[%s3 + $0xc] sm:$0xf]
      %v438 = vld [vmem:[%s3 + $0x10] sm:$0xf]
      %v439 = vld [vmem:[%s3 + $0x14] sm:$0xf]
      %v440 = vld [vmem:[%s3 + $0x18] sm:$0xf]
      %v441 = vld [vmem:[%s3 + $0x1c] sm:$0xf]
      %v442 = vld [vmem:[%s3 + $0x20] sm:$0xf]
      %v443 = vld [vmem:[%s3 + $0x24] sm:$0xf]
      %v444 = vld [vmem:[%s3 + $0x28] sm:$0xf]
      %v445 = vld [vmem:[%s3 + $0x2c] sm:$0xf]
      %v446 = vld [vmem:[%s3 + $0x30] sm:$0xf]
      %v447 = vld [vmem:[%s3 + $0x34] sm:$0xf]
      %v448 = vld [vmem:[%s3 + $0x38] sm:$0xf]
      %v449 = vld [vmem:[%s3 + $0x3c] sm:$0xf]
      %v466 = vunpack.c.l.b16 %v434
      %v467 = vunpack.c.l.b16 %v435
      %v468 = vunpack.c.l.b16 %v436
      %v469 = vunpack.c.l.b16 %v437
      %v470 = vunpack.c.l.b16 %v438
      %v471 = vunpack.c.l.b16 %v439
      %v472 = vunpack.c.l.b16 %v440
      %v473 = vunpack.c.l.b16 %v441
      %v474 = vunpack.c.l.b16 %v442
      %v475 = vunpack.c.l.b16 %v443
      %v476 = vunpack.c.l.b16 %v444
      %v477 = vunpack.c.l.b16 %v445
      %v478 = vunpack.c.l.b16 %v446
      %v479 = vunpack.c.l.b16 %v447
      %v480 = vunpack.c.l.b16 %v448
      %v481 = vunpack.c.l.b16 %v449
      %v482 = vpack.c.b16 %v467, %v466
      %v483 = vpack.c.b16 %v469, %v468
      %v484 = vpack.c.b16 %v471, %v470
      %v485 = vpack.c.b16 %v473, %v472
      %v486 = vpack.c.b16 %v475, %v474
      %v487 = vpack.c.b16 %v477, %v476
      %v488 = vpack.c.b16 %v479, %v478
      %v489 = vpack.c.b16 %v481, %v480
      %498 = vmatprep.subr.bf16.mxu0 0
      %499 = vmatpush1.bf16.msra.mxu0 %v489
      %500 = vmatprep.subr.bf16.mxu0 0
      %501 = vmatpush1.bf16.msra.mxu0 %v488
      %502 = vmatprep.subr.bf16.mxu0 0
      %503 = vmatpush1.bf16.msra.mxu0 %v487
      %504 = vmatprep.subr.bf16.mxu0 0
      %505 = vmatpush1.bf16.msra.mxu0 %v486
      %506 = vmatprep.subr.bf16.mxu0 0
      %507 = vmatpush1.bf16.msra.mxu0 %v485
      %508 = vmatprep.subr.bf16.mxu0 0
      %509 = vmatpush1.bf16.msra.mxu0 %v484
      %510 = vmatprep.subr.bf16.mxu0 0
      %511 = vmatpush1.bf16.msra.mxu0 %v483
      %512 = vmatprep.subr.bf16.mxu0 0
      %513 = vmatpush1.bf16.msra.mxu0 %v482
      %514 = vmatprep.subr.bf16.mxu0 0
      %515 = vmatpush2.bf16.msra.mxu0 0
      %516 = vmatprep.subr.bf16.mxu0 0
      %517 = vmatpush2.bf16.msra.mxu0 0
      %518 = vmatprep.subr.bf16.mxu0 0
      %519 = vmatpush2.bf16.msra.mxu0 0
      %520 = vmatprep.subr.bf16.mxu0 0
      %521 = vmatpush2.bf16.msra.mxu0 0
      %522 = vmatprep.subr.bf16.mxu0 0
      %523 = vmatpush2.bf16.msra.mxu0 0
      %524 = vmatprep.subr.bf16.mxu0 0
      %525 = vmatpush2.bf16.msra.mxu0 0
      %526 = vmatprep.subr.bf16.mxu0 0
      %527 = vmatpush2.bf16.msra.mxu0 0
      %528 = vmatprep.subr.bf16.mxu0 0
      %529 = vmatpush2.bf16.msra.mxu0 0
      %530 = vmatprep.mubr.bf16.mxu0 0
      %531 = vmatmul.mubr.bf16.gmra.mxu0 %v401
      %v532 = vpop.f32.mrf.mxu0
      %v533 = vadd.f32 0.0, %v532
      %v534 = vpop.f32.mrf.mxu0
      %v535 = vpop.f32.mrf.mxu0
      %v536 = vadd.f32 0.0, %v535
      %v537 = vpop.f32.mrf.mxu0
      %538 = vdwg.mxu0
      %v539 = vunpack.c.h.b16 %v374
      %v540 = vunpack.c.h.b16 %v375
      %v541 = vpack.c.b16 %v540, %v539
      %v576 = vunpack.c.l.b16 %v402
      %v577 = vunpack.c.l.b16 %v403
      %v578 = vunpack.c.l.b16 %v404
      %v579 = vunpack.c.l.b16 %v405
      %v580 = vunpack.c.l.b16 %v406
      %v581 = vunpack.c.l.b16 %v407
      %v582 = vunpack.c.l.b16 %v408
      %v583 = vunpack.c.l.b16 %v409
      %v584 = vunpack.c.l.b16 %v410
      %v585 = vunpack.c.l.b16 %v411
      %v586 = vunpack.c.l.b16 %v412
      %v587 = vunpack.c.l.b16 %v413
      %v588 = vunpack.c.l.b16 %v414
      %v589 = vunpack.c.l.b16 %v415
      %v590 = vunpack.c.l.b16 %v416
      %v591 = vunpack.c.l.b16 %v417
      %v592 = vunpack.c.l.b16 %v418
      %v593 = vunpack.c.l.b16 %v419
      %v594 = vunpack.c.l.b16 %v420
      %v595 = vunpack.c.l.b16 %v421
      %v596 = vunpack.c.l.b16 %v422
      %v597 = vunpack.c.l.b16 %v423
      %v598 = vunpack.c.l.b16 %v424
      %v599 = vunpack.c.l.b16 %v425
      %v600 = vunpack.c.l.b16 %v426
      %v601 = vunpack.c.l.b16 %v427
      %v602 = vunpack.c.l.b16 %v428
      %v603 = vunpack.c.l.b16 %v429
      %v604 = vunpack.c.l.b16 %v430
      %v605 = vunpack.c.l.b16 %v431
      %v606 = vunpack.c.l.b16 %v432
      %v607 = vunpack.c.l.b16 %v433
      %v608 = vpack.c.b16 %v577, %v576
      %v609 = vpack.c.b16 %v579, %v578
      %v610 = vpack.c.b16 %v581, %v580
      %v611 = vpack.c.b16 %v583, %v582
      %v612 = vpack.c.b16 %v585, %v584
      %v613 = vpack.c.b16 %v587, %v586
      %v614 = vpack.c.b16 %v589, %v588
      %v615 = vpack.c.b16 %v591, %v590
      %v616 = vpack.c.b16 %v593, %v592
      %v617 = vpack.c.b16 %v595, %v594
      %v618 = vpack.c.b16 %v597, %v596
      %v619 = vpack.c.b16 %v599, %v598
      %v620 = vpack.c.b16 %v601, %v600
      %v621 = vpack.c.b16 %v603, %v602
      %v622 = vpack.c.b16 %v605, %v604
      %v623 = vpack.c.b16 %v607, %v606
      %640 = vmatprep.subr.bf16.mxu0 0
      %641 = vmatpush1.bf16.msra.mxu0 %v615
      %642 = vmatprep.subr.bf16.mxu0 0
      %643 = vmatpush1.bf16.msra.mxu0 %v614
      %644 = vmatprep.subr.bf16.mxu0 0
      %645 = vmatpush1.bf16.msra.mxu0 %v613
      %646 = vmatprep.subr.bf16.mxu0 0
      %647 = vmatpush1.bf16.msra.mxu0 %v612
      %648 = vmatprep.subr.bf16.mxu0 0
      %649 = vmatpush1.bf16.msra.mxu0 %v611
      %650 = vmatprep.subr.bf16.mxu0 0
      %651 = vmatpush1.bf16.msra.mxu0 %v610
      %652 = vmatprep.subr.bf16.mxu0 0
      %653 = vmatpush1.bf16.msra.mxu0 %v609
      %654 = vmatprep.subr.bf16.mxu0 0
      %655 = vmatpush1.bf16.msra.mxu0 %v608
      %656 = vmatprep.subr.bf16.mxu0 0
      %657 = vmatpush2.bf16.msra.mxu0 %v623
      %658 = vmatprep.subr.bf16.mxu0 0
      %659 = vmatpush2.bf16.msra.mxu0 %v622
      %660 = vmatprep.subr.bf16.mxu0 0
      %661 = vmatpush2.bf16.msra.mxu0 %v621
      %662 = vmatprep.subr.bf16.mxu0 0
      %663 = vmatpush2.bf16.msra.mxu0 %v620
      %664 = vmatprep.subr.bf16.mxu0 0
      %665 = vmatpush2.bf16.msra.mxu0 %v619
      %666 = vmatprep.subr.bf16.mxu0 0
      %667 = vmatpush2.bf16.msra.mxu0 %v618
      %668 = vmatprep.subr.bf16.mxu0 0
      %669 = vmatpush2.bf16.msra.mxu0 %v617
      %670 = vmatprep.subr.bf16.mxu0 0
      %671 = vmatpush2.bf16.msra.mxu0 %v616
      %672 = vmatprep.mubr.bf16.mxu0 %v541
      %673 = vmatmul.mubr.bf16.gmra.mxu0 %v381
      %v674 = vpop.f32.mrf.mxu0
      %v675 = vadd.f32 %v533, %v674
      %v676 = vpop.f32.mrf.mxu0
      %v677 = vpop.f32.mrf.mxu0
      %v678 = vadd.f32 %v536, %v677
      %v679 = vpop.f32.mrf.mxu0
      %680 = vdwg.mxu0
      %s681 = smul.u32 %s23, 16
      %v682 = vlaneseq
      %v683 = vshrl.u32 %v682, 7
      %v684 = vadd.s32 %v683, 8
      %v685 = vstv %s681
      %v686 = vadd.s32 %v683, %v685
      %v687 = vadd.s32 %v684, %v685
      %vm688 = vcmp.lt.s32.totalorder %v686, 4
      %vm689 = vcmp.lt.s32.totalorder %v687, 4
      %v690 = vsel %vm688, %v675, 0.0
      %v691 = vsel %vm689, %v678, 0.0
      %v692 = vpack.c.bf16 %v691, %v690
      %v694 = vunpack.c.l.b16 %v692
      %v695 = vunpack.c.h.b16 %v692
      %v696 = vpack.c.b16 %v694, %v694
      %v697 = vpack.c.b16 %v695, %v695
      %700 = vst [vmem:[%s359] sm:$0xf] %v696
      %701 = vst [vmem:[%s359 + $0x4] sm:$0xf] %v697
      %v702 = vadd.f32 %v690, %v691
      %v703 = vrot.slane %v702, 4
      %v704 = vadd.f32 %v702, %v703
      %v705 = vrot.slane %v704, 2
      %v706 = vadd.f32 %v704, %v705
      %v707 = vrot.slane %v706, 1
      %v708 = vadd.f32 %v706, %v707
      %709 = vst [vmem:[%s366] sm:$0x1] %v708
      %v710 = vmul.f32 %v690, %v690
      %v711 = vmul.f32 %v691, %v691
      %v712 = vadd.f32 %v710, %v711
      %v713 = vrot.slane %v712, 4
      %v714 = vadd.f32 %v712, %v713
      %v715 = vrot.slane %v714, 2
      %v716 = vadd.f32 %v714, %v715
      %v717 = vrot.slane %v716, 1
      %v718 = vadd.f32 %v716, %v717
      %719 = vst [vmem:[%s372] sm:$0x1] %v718
      %s720 = smul.u32 2, %s23
      %p721 = scmp.lt.s32.totalorder %s22, 1
      %s722 = scalar_select %p721, %s22, 1
      %p723 = scmp.lt.s32.totalorder %s720, 1
      %s724 = scalar_select %p723, %s720, 1
      %s725 = smul.addr %s722, 2
      %s726 = sadd.s32 %s724, %s725
      %s727 = smul.addr %s726, 4
      %s728 = scalar_lea.vmem %s4, %s727
      %p729 = scmp.lt.s32.totalorder %s22, 1
      %s730 = scalar_select %p729, %s22, 1
      %p731 = scmp.lt.s32.totalorder %s23, 0
      %s732 = scalar_select %p731, %s23, 0
      %s733 = sadd.s32 %s732, %s730
      %s734 = scalar_lea.vmem %s5, %s733
      %p735 = scmp.lt.s32.totalorder %s22, 1
      %s736 = scalar_select %p735, %s22, 1
      %p737 = scmp.lt.s32.totalorder %s23, 0
      %s738 = scalar_select %p737, %s23, 0
      %s739 = sadd.s32 %s738, %s736
      %s740 = scalar_lea.vmem %s6, %s739
      // Predicated region
      $region37: #{feature_extractor_forward.4} parent=35 // pred_check
        %p741 = pneg %p150
      $region38: #{feature_extractor_forward.4} parent=35 // pred_check_branch
        %743 = sbr.rel (%p741) target = $region40
      $region39: #{feature_extractor_forward.4} parent=35 // pred_region
        %s744 = smul.u32 2, %s23
      $region40: #{feature_extractor_forward.4} parent=35 // pred_fallthru
        _
      // Predicated region
      $region41: #{feature_extractor_forward.4} parent=35 // pred_check
        %p745 = pneg %p178
      $region42: #{feature_extractor_forward.4} parent=35 // pred_check_branch
        %747 = sbr.rel (%p745) target = $region44
      $region43: #{feature_extractor_forward.4} parent=35 // pred_region
        _
      $region44: #{feature_extractor_forward.4} parent=35 // pred_fallthru
        _
      // Predicated region
      $region45: #{feature_extractor_forward.4} parent=35 // pred_check
        %p748 = pneg %p206
      $region46: #{feature_extractor_forward.4} parent=35 // pred_check_branch
        %750 = sbr.rel (%p748) target = $region48
      $region47: #{feature_extractor_forward.4} parent=35 // pred_region
        _
      $region48: #{feature_extractor_forward.4} parent=35 // pred_fallthru
        _
    $region36: #{feature_extractor_forward.4} parent=5 // pred_fallthru
      _
    %p751 = scmp.le.s32.totalorder 2, %s13
    // Predicated region
    $region49: #{feature_extractor_forward.4} parent=5 // pred_check
      %p752 = pneg %p751
    $region50: #{feature_extractor_forward.4} parent=5 // pred_check_branch
      %754 = sbr.rel (%p752) target = $region52
    $region51: #{feature_extractor_forward.4} parent=5 // pred_region
      %s755 = ssub.s32 %s13, 2
      // Predicated region
      $region53: #{feature_extractor_forward.4} parent=51 // pred_check
        %p756 = pneg %p156
      $region54: #{feature_extractor_forward.4} parent=51 // pred_check_branch
        %758 = sbr.rel (%p756) target = $region56
      $region55: #{feature_extractor_forward.4} parent=51 // pred_region
        %s759 = smul.u32 2, %s25
        %p760 = scmp.lt.s32.totalorder %s24, 1
        %s761 = scalar_select %p760, %s24, 1
        %p762 = scmp.lt.s32.totalorder %s759, 1
        %s763 = scalar_select %p762, %s759, 1
        %s764 = smul.addr %s761, 2
        %s765 = sadd.s32 %s763, %s764
        %s766 = smul.addr %s765, 4
        %s767 = scalar_lea.vmem %s4, %s766
      $region56: #{feature_extractor_forward.4} parent=51 // pred_fallthru
        _
      // Predicated region
      $region57: #{feature_extractor_forward.4} parent=51 // pred_check
        %p768 = pneg %p184
      $region58: #{feature_extractor_forward.4} parent=51 // pred_check_branch
        %770 = sbr.rel (%p768) target = $region60
      $region59: #{feature_extractor_forward.4} parent=51 // pred_region
        %p771 = scmp.lt.s32.totalorder %s24, 1
        %s772 = scalar_select %p771, %s24, 1
        %p773 = scmp.lt.s32.totalorder %s25, 0
        %s774 = scalar_select %p773, %s25, 0
        %s775 = sadd.s32 %s774, %s772
        %s776 = scalar_lea.vmem %s5, %s775
      $region60: #{feature_extractor_forward.4} parent=51 // pred_fallthru
        _
      // Predicated region
      $region61: #{feature_extractor_forward.4} parent=51 // pred_check
        %p777 = pneg %p212
      $region62: #{feature_extractor_forward.4} parent=51 // pred_check_branch
        %779 = sbr.rel (%p777) target = $region64
      $region63: #{feature_extractor_forward.4} parent=51 // pred_region
        %p780 = scmp.lt.s32.totalorder %s24, 1
        %s781 = scalar_select %p780, %s24, 1
        %p782 = scmp.lt.s32.totalorder %s25, 0
        %s783 = scalar_select %p782, %s25, 0
        %s784 = sadd.s32 %s783, %s781
        %s785 = scalar_lea.vmem %s6, %s784
      $region64: #{feature_extractor_forward.4} parent=51 // pred_fallthru
        _
    $region52: #{feature_extractor_forward.4} parent=5 // pred_fallthru
      _
  $region6: #{feature_extractor_forward.4} parent=0 // loop_footer
    %s17 = sadd.s32 1, %s13
  $region7: #{feature_extractor_forward.4} parent=0 // loop_footer_branch
    %12 = sbr.rel target = $region3
  $region8: #{feature_extractor_forward.4} parent=0 // loop_exit
    _

</llo_original>
